<compile_context>
chip_gen: v5e
topology: v5e:2x2
jax: 0.10.0
libtpu: 0.0.40
codegen_flags: <defaults>
</compile_context>

<pallas_src>
import functools

import jax
import jax.numpy as jnp
from jax.experimental import pallas as pl
from jax.experimental.pallas import tpu as pltpu

LANE = 128


def _round_up(x, m):
    return (x + m - 1) // m * m


def _pick_row_tile(n, tm_max):
    """Largest row tile that is a multiple of 16 and divides n (falls back to full n)."""
    if n <= tm_max:
        return n
    start = (min(tm_max, n) // 16) * 16
    for tm in range(start, 15, -16):
        if n % tm == 0:
            return tm
    # TODO(synk): masked row padding for node counts with no suitable divisor.
    return n


# -----------------------------------------------------------------------------
# Fused kernel: grid = (num_layers, num_row_tiles), both axes sequential.
# Refs: A' row tile (bf16), padded feat (bf16, resident), per-layer W/b/gamma/beta,
#       output (f32, resident), scratch: H (bf16) and pre-activation (f32).
# -----------------------------------------------------------------------------
def fused_gin_bn_kernel(a_ref, feat_ref, w_ref, b_ref, gamma_ref, beta_ref,
                        out_ref, h_ref, pre_ref, *, bn_eps):
    layer = pl.program_id(0)
    tile = pl.program_id(1)
    num_layers = pl.num_programs(0)
    num_tiles = pl.num_programs(1)
    tm = a_ref.shape[0]          # rows in this tile (static)
    n = pre_ref.shape[0]         # total number of nodes (static)

    # One-time init: stage the padded bf16 input features into the resident H scratch.
    @pl.when(jnp.logical_and(layer == 0, tile == 0))
    def _():
        h_ref[...] = feat_ref[...]

    # GIN aggregation for this row tile (bf16 operands, f32 accumulation on the MXU):
    #   agg = (A + (1 + eps) I)[rows, :] @ H
    agg = jnp.dot(a_ref[...], h_ref[...], preferred_element_type=jnp.float32)

    # GIN apply_func (Linear), f32:  pre = agg @ W_l + b_l
    pre = jnp.dot(agg, w_ref[0], preferred_element_type=jnp.float32) + b_ref[0]

    row0 = pl.multiple_of(tile * tm, tm)
    pre_ref[pl.ds(row0, tm), :] = pre

    # Layer finalize on the last row tile: BatchNorm1d (training-mode batch statistics)
    # + ReLU on every layer except the last. The whole layer's `pre` is VMEM-resident.
    @pl.when(tile == num_tiles - 1)
    def _():
        p = pre_ref[...]                                   # [N, Dpad] f32
        inv_n = 1.0 / n
        mean = jnp.sum(p, axis=0, keepdims=True) * inv_n
        centered = p - mean
        var = jnp.sum(centered * centered, axis=0, keepdims=True) * inv_n
        y = (centered * jax.lax.rsqrt(var + bn_eps)        # rsqrt -> EUP slot
             * gamma_ref[0] + beta_ref[0])

        @pl.when(layer < num_layers - 1)
        def _():
            h_ref[...] = jnp.maximum(y, 0.0).astype(h_ref.dtype)

        @pl.when(layer == num_layers - 1)
        def _():
            out_ref[...] = y.astype(out_ref.dtype)


# -----------------------------------------------------------------------------
# Wrapper mirroring HomogeneousGraphModel.forward (JK='last').
# -----------------------------------------------------------------------------
def homogeneous_graph_model_forward(adj, feat, params, *, jk="last",
                                    gin_eps=0.0, bn_eps=1e-5, tm_max=512):
    if jk != "last":
        # TODO(synk): JK='sum' (needs all intermediate h's; only valid when inp_dim == out_dim).
        raise NotImplementedError("only JK='last' is implemented")

    n, inp_dim = feat.shape
    out_dim = params[0]["w"].shape[1]
    num_layers = len(params)
    d_pad = _round_up(max(inp_dim, out_dim), LANE)

    # Fold the GIN self term into the adjacency: A' = A + (1+eps) I  (exact in bf16 for eps=0).
    a_aug = (adj.astype(jnp.float32)
             + (1.0 + gin_eps) * jnp.eye(n, dtype=jnp.float32)).astype(jnp.bfloat16)

    # Zero-pad features / params to a lane-dense 128-wide layout; padded lanes stay exactly 0
    # through every layer (zero weights/bias/gamma/beta), so we slice them off only at the end.
    feat_p = jnp.zeros((n, d_pad), jnp.bfloat16).at[:, :inp_dim].set(
        feat.astype(jnp.bfloat16))
    w_s = jnp.zeros((num_layers, d_pad, d_pad), jnp.float32)
    b_s = jnp.zeros((num_layers, 1, d_pad), jnp.float32)
    g_s = jnp.zeros((num_layers, 1, d_pad), jnp.float32)
    be_s = jnp.zeros((num_layers, 1, d_pad), jnp.float32)
    for l, p in enumerate(params):
        w = p["w"]
        w_s = w_s.at[l, :w.shape[0], :w.shape[1]].set(w)
        b_s = b_s.at[l, 0, :out_dim].set(p["b"].reshape(-1))
        g_s = g_s.at[l, 0, :out_dim].set(p["gamma"].reshape(-1))
        be_s = be_s.at[l, 0, :out_dim].set(p["beta"].reshape(-1))

    tm = _pick_row_tile(n, tm_max)
    num_tiles = n // tm
    assert tm * num_tiles == n

    # Explicit VMEM budget (double-buffered A row blocks + resident feat/out + scratch),
    # clamped to v7x's 64 MiB so the same code is safe across TPU generations.
    est = (2 * tm * n * 2            # A' row blocks (bf16, double-buffered)
           + 2 * n * d_pad * 2       # padded features (resident block)
           + 2 * d_pad * d_pad * 4   # W_l block
           + 2 * n * d_pad * 4       # output block
           + n * d_pad * (2 + 4)     # H (bf16) + pre (f32) scratch
           + 6 * d_pad * 4)          # b / gamma / beta blocks
    vmem_limit = min(64 * 1024 * 1024, max(int(1.5 * est), 16 * 1024 * 1024))

    flops = num_layers * (2 * n * n * d_pad + 2 * n * d_pad * d_pad)
    bytes_accessed = (n * n * 2 + n * d_pad * 2
                      + num_layers * (d_pad * d_pad + 3 * d_pad) * 4 + n * d_pad * 4)

    out_padded = pl.pallas_call(
        functools.partial(fused_gin_bn_kernel, bn_eps=bn_eps),
        out_shape=jax.ShapeDtypeStruct((n, d_pad), jnp.float32),
        grid_spec=pltpu.PrefetchScalarGridSpec(
            num_scalar_prefetch=0,
            grid=(num_layers, num_tiles),
            in_specs=[
                pl.BlockSpec((tm, n), lambda l, i: (i, 0)),               # A' row tile
                pl.BlockSpec((n, d_pad), lambda l, i: (0, 0)),            # padded feat (resident)
                pl.BlockSpec((1, d_pad, d_pad), lambda l, i: (l, 0, 0)),  # W_l
                pl.BlockSpec((1, 1, d_pad), lambda l, i: (l, 0, 0)),      # b_l
                pl.BlockSpec((1, 1, d_pad), lambda l, i: (l, 0, 0)),      # gamma_l
                pl.BlockSpec((1, 1, d_pad), lambda l, i: (l, 0, 0)),      # beta_l
            ],
            out_specs=pl.BlockSpec((n, d_pad), lambda l, i: (0, 0)),      # resident output
            scratch_shapes=[
                pltpu.VMEM((n, d_pad), jnp.bfloat16),   # H: current layer input (persists)
                pltpu.VMEM((n, d_pad), jnp.float32),    # per-layer pre-activation for BN
            ],
        ),
        compiler_params=pltpu.CompilerParams(
            # Both axes must be sequential: layers depend on each other, and BN needs all
            # row tiles of a layer before the finalize step.
            dimension_semantics=("arbitrary", "arbitrary"),
            vmem_limit_bytes=vmem_limit,
        ),
        cost_estimate=pl.CostEstimate(
            flops=int(flops),
            transcendentals=int(num_layers * d_pad),
            bytes_accessed=int(bytes_accessed),
        ),
    )(a_aug, feat_p, w_s, b_s, g_s, be_s)

    return out_padded[:, :out_dim]


# -----------------------------------------------------------------------------
# Pure-JAX f32 reference (same math, no bf16) for a sanity check.
# -----------------------------------------------------------------------------
def reference_forward(adj, feat, params, *, gin_eps=0.0, bn_eps=1e-5):
    n = adj.shape[0]
    with jax.default_matmul_precision("float32"):
        a = adj.astype(jnp.float32) + (1.0 + gin_eps) * jnp.eye(n, dtype=jnp.float32)
        h = feat.astype(jnp.float32)
        num_layers = len(params)
        for l, p in enumerate(params):
            pre = (a @ h) @ p["w"] + p["b"][None, :]
            mean = jnp.mean(pre, axis=0, keepdims=True)
            var = jnp.mean((pre - mean) ** 2, axis=0, keepdims=True)
            y = ((pre - mean) * jax.lax.rsqrt(var + bn_eps) * p["gamma"][None, :]
                 + p["beta"][None, :])
            h = jnp.maximum(y, 0.0) if l < num_layers - 1 else y
    return h


def init_params(key, num_layers, inp_dim, out_dim):
    params = []
    for layer in range(num_layers):
        d_in = inp_dim if layer == 0 else out_dim
        key, kw, kb = jax.random.split(key, 3)
        bound = 1.0 / (d_in ** 0.5)
        params.append({
            "w": jax.random.uniform(kw, (d_in, out_dim), jnp.float32, -bound, bound),
            "b": jax.random.uniform(kb, (out_dim,), jnp.float32, -bound, bound),
            "gamma": jnp.ones((out_dim,), jnp.float32),
            "beta": jnp.zeros((out_dim,), jnp.float32),
        })
    return params


if __name__ == "__main__":
    key = jax.random.PRNGKey(0)
    num_layers, inp_dim, out_dim, num_nodes = 3, 16, 32, 256

    k_adj, k_feat, k_param = jax.random.split(key, 3)

    # Deterministic random undirected graph: dense 0/1 adjacency, no self loops.
    a = jax.random.bernoulli(k_adj, p=0.1, shape=(num_nodes, num_nodes))
    a = jnp.logical_or(a, a.T)
    a = a.astype(jnp.float32) * (1.0 - jnp.eye(num_nodes, dtype=jnp.float32))

    feat = jax.random.normal(k_feat, (num_nodes, inp_dim), jnp.float32)
    params = init_params(k_param, num_layers, inp_dim, out_dim)

    # tm_max=128 -> two row tiles of A, exercising the tiled / pipelined path.
    out = homogeneous_graph_model_forward(a, feat, params, jk="last", tm_max=128)
    out = jax.block_until_ready(out)

    assert out.shape == (num_nodes, out_dim)
    assert bool(jnp.all(jnp.isfinite(out)))

    # Loose tolerances: the kernel runs the dominant aggregation matmul in bf16 (f32 accum).
    ref = reference_forward(a, feat, params)
    max_err = float(jnp.max(jnp.abs(out - ref)))
    mean_err = float(jnp.mean(jnp.abs(out - ref)))
    assert max_err < 0.5 and mean_err < 0.1, (max_err, mean_err)

    print("KERNEL_OK")
</pallas_src>

<mosaic_0001>
module attributes {stable_mosaic.version = 11 : i64} {
  func.func @fused_gin_bn_kernel(%arg0: i32, %arg1: i32, %arg2: memref<128x256xbf16, #tpu.memory_space<vmem>>, %arg3: memref<256x128xbf16, #tpu.memory_space<vmem>>, %arg4: memref<1x128x128xf32, #tpu.memory_space<vmem>>, %arg5: memref<1x1x128xf32, #tpu.memory_space<vmem>>, %arg6: memref<1x1x128xf32, #tpu.memory_space<vmem>>, %arg7: memref<1x1x128xf32, #tpu.memory_space<vmem>>, %arg8: memref<256x128xf32, #tpu.memory_space<vmem>>, %arg9: memref<256x128xbf16, #tpu.memory_space<vmem>>, %arg10: memref<256x128xf32, #tpu.memory_space<vmem>>) attributes {dimension_semantics = [#tpu.dimension_semantics<arbitrary>, #tpu.dimension_semantics<arbitrary>], iteration_bounds = array<i64: 3, 2>, scalar_prefetch = 0 : i64, scratch_operands = 2 : i64, tpu.core_type = #tpu.core_type<tc>, window_params = [{transform_indices = @transform_0, window_bounds = array<i64: 128, 256>}, {pipeline_mode = #tpu.pipeline_mode<synchronous>, transform_indices = @transform_1, window_bounds = array<i64: 256, 128>}, {transform_indices = @transform_2, window_bounds = array<i64: 1, 128, 128>}, {transform_indices = @transform_3, window_bounds = array<i64: 1, 1, 128>}, {transform_indices = @transform_4, window_bounds = array<i64: 1, 1, 128>}, {transform_indices = @transform_5, window_bounds = array<i64: 1, 1, 128>}, {pipeline_mode = #tpu.pipeline_mode<synchronous>, transform_indices = @transform_6, window_bounds = array<i64: 256, 128>}]} {
    %c0_i32 = arith.constant 0 : i32
    %0 = arith.cmpi eq, %arg0, %c0_i32 : i32
    %c0_i32_0 = arith.constant 0 : i32
    %1 = arith.cmpi eq, %arg1, %c0_i32_0 : i32
    %2 = arith.andi %0, %1 : i1
    %3 = arith.extui %2 : i1 to i32
    %c0_i32_1 = arith.constant 0 : i32
    %4 = arith.cmpi ne, %3, %c0_i32_1 : i32
    scf.if %4 {
      %c0_14 = arith.constant 0 : index
      %c0_15 = arith.constant 0 : index
      %22 = vector.load %arg3[%c0_14, %c0_15] : memref<256x128xbf16, #tpu.memory_space<vmem>>, vector<256x128xbf16>
      %c0_16 = arith.constant 0 : index
      %c0_17 = arith.constant 0 : index
      %23 = vector.load %arg9[%c0_16, %c0_17] : memref<256x128xbf16, #tpu.memory_space<vmem>>, vector<256x128xbf16>
      tpu.vector_store %arg9[%c0_16, %c0_17], %22 {strides = array<i32>} : memref<256x128xbf16, #tpu.memory_space<vmem>>, vector<256x128xbf16>,
    } else {
    }
    %c0 = arith.constant 0 : index
    %c0_2 = arith.constant 0 : index
    %5 = vector.load %arg2[%c0, %c0_2] : memref<128x256xbf16, #tpu.memory_space<vmem>>, vector<128x256xbf16>
    %c0_3 = arith.constant 0 : index
    %c0_4 = arith.constant 0 : index
    %6 = vector.load %arg9[%c0_3, %c0_4] : memref<256x128xbf16, #tpu.memory_space<vmem>>, vector<256x128xbf16>
    %cst = arith.constant dense<0.000000e+00> : vector<128x128xf32>
    %7 = tpu.matmul %5, %6, %cst {dimension_numbers = #tpu.dot_dimension_numbers<[1], [0], [0], [1], [0, 0, 1, 1], [], []>} : vector<128x256xbf16>, vector<256x128xbf16>, vector<128x128xf32> -> vector<128x128xf32>
    %c0_5 = arith.constant 0 : index
    %c0_6 = arith.constant 0 : index
    %c0_7 = arith.constant 0 : index
    %8 = vector.load %arg4[%c0_5, %c0_6, %c0_7] : memref<1x128x128xf32, #tpu.memory_space<vmem>>, vector<1x128x128xf32>
    %9 = vector.shape_cast %8 : vector<1x128x128xf32> to vector<128x128xf32>
    %cst_8 = arith.constant dense<0.000000e+00> : vector<128x128xf32>
    %10 = tpu.matmul %7, %9, %cst_8 {dimension_numbers = #tpu.dot_dimension_numbers<[1], [0], [0], [1], [0, 0, 1, 1], [], []>} : vector<128x128xf32>, vector<128x128xf32>, vector<128x128xf32> -> vector<128x128xf32>
    %c0_9 = arith.constant 0 : index
    %c0_10 = arith.constant 0 : index
    %c0_11 = arith.constant 0 : index
    %11 = vector.load %arg5[%c0_9, %c0_10, %c0_11] : memref<1x1x128xf32, #tpu.memory_space<vmem>>, vector<1x1x128xf32>
    %12 = vector.shape_cast %11 : vector<1x1x128xf32> to vector<1x128xf32>
    %13 = vector.broadcast %12 : vector<1x128xf32> to vector<128x128xf32>
    %14 = arith.addf %10, %13 : vector<128x128xf32>
    %c128_i32 = arith.constant 128 : i32
    %15 = arith.muli %arg1, %c128_i32 : i32
    %16 = tpu.assume_multiple %15, 128 : i32
    %17 = arith.index_cast %16 : i32 to index
    %c0_12 = arith.constant 0 : index
    %18 = vector.load %arg10[%17, %c0_12] : memref<256x128xf32, #tpu.memory_space<vmem>>, vector<128x128xf32>
    tpu.vector_store %arg10[%17, %c0_12], %14 {strides = array<i32>} : memref<256x128xf32, #tpu.memory_space<vmem>>, vector<128x128xf32>,
    %c1_i32 = arith.constant 1 : i32
    %19 = arith.cmpi eq, %arg1, %c1_i32 : i32
    %20 = arith.extui %19 : i1 to i32
    %c0_i32_13 = arith.constant 0 : i32
    %21 = arith.cmpi ne, %20, %c0_i32_13 : i32
    scf.if %21 {
      %c0_14 = arith.constant 0 : index
      %c0_15 = arith.constant 0 : index
      %22 = vector.load %arg10[%c0_14, %c0_15] : memref<256x128xf32, #tpu.memory_space<vmem>>, vector<256x128xf32>
      %cst_16 = arith.constant dense<0.000000e+00> : vector<128xf32>
      %23 = vector.multi_reduction <add>, %22, %cst_16 [0] : vector<256x128xf32> to vector<128xf32>
      %24 = vector.shape_cast %23 : vector<128xf32> to vector<1x128xf32>
      %cst_17 = arith.constant 3.906250e-03 : f32
      %25 = vector.broadcast %cst_17 : f32 to vector<1x128xf32>
      %26 = arith.mulf %24, %25 : vector<1x128xf32>
      %27 = vector.broadcast %26 : vector<1x128xf32> to vector<256x128xf32>
      %28 = arith.subf %22, %27 : vector<256x128xf32>
      %29 = arith.mulf %28, %28 : vector<256x128xf32>
      %cst_18 = arith.constant dense<0.000000e+00> : vector<128xf32>
      %30 = vector.multi_reduction <add>, %29, %cst_18 [0] : vector<256x128xf32> to vector<128xf32>
      %31 = vector.shape_cast %30 : vector<128xf32> to vector<1x128xf32>
      %cst_19 = arith.constant 3.906250e-03 : f32
      %32 = vector.broadcast %cst_19 : f32 to vector<1x128xf32>
      %33 = arith.mulf %31, %32 : vector<1x128xf32>
      %cst_20 = arith.constant 9.99999974E-6 : f32
      %34 = vector.broadcast %cst_20 : f32 to vector<1x128xf32>
      %35 = arith.addf %33, %34 : vector<1x128xf32>
      %36 = math.rsqrt %35 : vector<1x128xf32>
      %37 = vector.broadcast %36 : vector<1x128xf32> to vector<256x128xf32>
      %38 = arith.mulf %28, %37 : vector<256x128xf32>
      %c0_21 = arith.constant 0 : index
      %c0_22 = arith.constant 0 : index
      %c0_23 = arith.constant 0 : index
      %39 = vector.load %arg6[%c0_21, %c0_22, %c0_23] : memref<1x1x128xf32, #tpu.memory_space<vmem>>, vector<1x1x128xf32>
      %40 = vector.shape_cast %39 : vector<1x1x128xf32> to vector<1x128xf32>
      %41 = vector.broadcast %40 : vector<1x128xf32> to vector<256x128xf32>
      %42 = arith.mulf %38, %41 : vector<256x128xf32>
      %c0_24 = arith.constant 0 : index
      %c0_25 = arith.constant 0 : index
      %c0_26 = arith.constant 0 : index
      %43 = vector.load %arg7[%c0_24, %c0_25, %c0_26] : memref<1x1x128xf32, #tpu.memory_space<vmem>>, vector<1x1x128xf32>
      %44 = vector.shape_cast %43 : vector<1x1x128xf32> to vector<1x128xf32>
      %45 = vector.broadcast %44 : vector<1x128xf32> to vector<256x128xf32>
      %46 = arith.addf %42, %45 : vector<256x128xf32>
      %c2_i32 = arith.constant 2 : i32
      %47 = arith.cmpi slt, %arg0, %c2_i32 : i32
      %48 = arith.extui %47 : i1 to i32
      %c0_i32_27 = arith.constant 0 : i32
      %49 = arith.cmpi ne, %48, %c0_i32_27 : i32
      scf.if %49 {
        %cst_30 = arith.constant 0.000000e+00 : f32
        %53 = vector.broadcast %cst_30 : f32 to vector<256x128xf32>
        %54 = arith.maximumf %46, %53 : vector<256x128xf32>
        %55 = arith.truncf %54 : vector<256x128xf32> to vector<256x128xbf16>
        %c0_31 = arith.constant 0 : index
        %c0_32 = arith.constant 0 : index
        %56 = vector.load %arg9[%c0_31, %c0_32] : memref<256x128xbf16, #tpu.memory_space<vmem>>, vector<256x128xbf16>
        tpu.vector_store %arg9[%c0_31, %c0_32], %55 {strides = array<i32>} : memref<256x128xbf16, #tpu.memory_space<vmem>>, vector<256x128xbf16>,
      } else {
      }
      %c2_i32_28 = arith.constant 2 : i32
      %50 = arith.cmpi eq, %arg0, %c2_i32_28 : i32
      %51 = arith.extui %50 : i1 to i32
      %c0_i32_29 = arith.constant 0 : i32
      %52 = arith.cmpi ne, %51, %c0_i32_29 : i32
      scf.if %52 {
        %c0_30 = arith.constant 0 : index
        %c0_31 = arith.constant 0 : index
        %53 = vector.load %arg8[%c0_30, %c0_31] : memref<256x128xf32, #tpu.memory_space<vmem>>, vector<256x128xf32>
        tpu.vector_store %arg8[%c0_30, %c0_31], %46 {strides = array<i32>} : memref<256x128xf32, #tpu.memory_space<vmem>>, vector<256x128xf32>,
      } else {
      }
    } else {
    }
    return
  }
  func.func @transform_0(%arg0: i32, %arg1: i32) -> (i32, i32) {
    %c0_i32 = arith.constant 0 : i32
    %c0_i32_0 = arith.constant 0 : i32
    return %arg1, %c0_i32 : i32, i32
  }
  func.func @transform_1(%arg0: i32, %arg1: i32) -> (i32, i32) {
    %c0_i32 = arith.constant 0 : i32
    %c0_i32_0 = arith.constant 0 : i32
    %c0_i32_1 = arith.constant 0 : i32
    return %c0_i32, %c0_i32_0 : i32, i32
  }
  func.func @transform_2(%arg0: i32, %arg1: i32) -> (i32, i32, i32) {
    %c0_i32 = arith.constant 0 : i32
    %c0_i32_0 = arith.constant 0 : i32
    %c0_i32_1 = arith.constant 0 : i32
    return %arg0, %c0_i32, %c0_i32_0 : i32, i32, i32
  }
  func.func @transform_3(%arg0: i32, %arg1: i32) -> (i32, i32, i32) {
    %c0_i32 = arith.constant 0 : i32
    %c0_i32_0 = arith.constant 0 : i32
    %c0_i32_1 = arith.constant 0 : i32
    return %arg0, %c0_i32, %c0_i32_0 : i32, i32, i32
  }
  func.func @transform_4(%arg0: i32, %arg1: i32) -> (i32, i32, i32) {
    %c0_i32 = arith.constant 0 : i32
    %c0_i32_0 = arith.constant 0 : i32
    %c0_i32_1 = arith.constant 0 : i32
    return %arg0, %c0_i32, %c0_i32_0 : i32, i32, i32
  }
  func.func @transform_5(%arg0: i32, %arg1: i32) -> (i32, i32, i32) {
    %c0_i32 = arith.constant 0 : i32
    %c0_i32_0 = arith.constant 0 : i32
    %c0_i32_1 = arith.constant 0 : i32
    return %arg0, %c0_i32, %c0_i32_0 : i32, i32, i32
  }
  func.func @transform_6(%arg0: i32, %arg1: i32) -> (i32, i32) {
    %c0_i32 = arith.constant 0 : i32
    %c0_i32_0 = arith.constant 0 : i32
    %c0_i32_1 = arith.constant 0 : i32
    return %c0_i32, %c0_i32_0 : i32, i32
  }
}

</mosaic_0001>

<llo_original>
// kernel: tpu_custom_call.1
$region0: #{tpu_custom_call.1}
  #allocation0 [shape = 'u32[]', space=smem, size = 0x4, offset = 0x4, fixed_abs, tag = 'smem constant byte address 0x4 - core index']
  #allocation1 [shape = 'u32[72,128]{1,0:T(1,128)}', space=vmem, size = 0x9000, scoped, tag = 'internal scratch']
  #allocation2 [shape = 'bf16[256,128]{1,0:T(8,128)(2,1)}', space=vmem, size = 0x10000, scoped, tag = 'scratch operand']
  #allocation3 [shape = 'f32[256,128]{1,0:T(8,128)}', space=vmem, size = 0x20000, scoped, tag = 'scratch operand']
  %s0 = inlined_call_operand.hbm [shape: bf16[256,256], index: 0, kind: input, shape index: {}]
  %s1 = inlined_call_operand.hbm [shape: bf16[256,128], index: 1, kind: input, shape index: {}]
  %s2 = inlined_call_operand.hbm [shape: f32[3,128,128], index: 2, kind: input, shape index: {}]
  %s3 = inlined_call_operand.hbm [shape: f32[3,1,128], index: 3, kind: input, shape index: {}]
  %s4 = inlined_call_operand.vmem [shape: f32[3,1,128], index: 4, kind: input, shape index: {}]
  %s5 = inlined_call_operand.hbm [shape: f32[3,1,128], index: 5, kind: input, shape index: {}]
  %s6 = inlined_call_operand.hbm [shape: f32[256,128], index: 6, kind: output, shape index: {}]
  %s7 = sld [smem:[#allocation0]]
  $region93: #{tpu_custom_call.1} parent=0
    _
  %s9 = ssub.s32 1, %s7
  %s10 = scalar_select 0, %s9, %s7
  $region1: #{tpu_custom_call.1} parent=0
    #allocation4 [shape = 'u8[131072]{0}', space=vmem, size = 0x20000, scoped, tag = 'input window, operand 0']
    #allocation5 [shape = 's32[2]{0}', space=sflag, size = 0x8, scoped, tag = 'scoped memory for tpu_custom_call.1']
    #allocation6 [shape = 's32[2]{0}', space=sflag, size = 0x8, scoped, tag = 'scoped memory for tpu_custom_call.1']
    #allocation7 [shape = 'u8[65536]{0}', space=vmem, size = 0x10000, scoped, tag = 'input window, operand 1, single buffered']
    #allocation8 [shape = 's32[1]{0}', space=sflag, size = 0x4, scoped, tag = 'scoped memory for tpu_custom_call.1']
    #allocation9 [shape = 'u8[131072]{0}', space=vmem, size = 0x20000, scoped, tag = 'input window, operand 2']
    #allocation10 [shape = 'u8[1024]{0}', space=vmem, size = 0x400, scoped, tag = 'input window, operand 3']
    #allocation11 [shape = 'u8[1024]{0}', space=vmem, size = 0x400, scoped, tag = 'input window, operand 5']
    #allocation12 [shape = 'u8[131072]{0}', space=vmem, size = 0x20000, scoped, tag = 'output window, operand 0, single buffered']
    %11 = vsyncpa [#allocation5], 0
    %s12 = scalar_lea.sflag [#allocation5], 1
    %13 = vsyncpa %s12, 0
    %14 = vsyncpa [#allocation8], 0
    %15 = vsyncpa [#allocation6], 0
    loop: start=0, step=1, limit=8
    $region2: #{tpu_custom_call.1} parent=1 // loop_pre_header
      _
    $region3: #{tpu_custom_call.1} parent=1 // loop_header
      %s17 = sphi 0, %s21
      %p18 = scmp.ge.s32.totalorder %s17, 8
      %s24 = sphi 0, %s36
      %s25 = sphi 0, %s32
      %s26 = sphi 0, %s24
      %s27 = sphi 0, %s25
      %s28 = sphi 0, %s26
      %s29 = sphi 0, %s27
      %s39 = sphi 0, %s41
      %s42 = sphi 0, %s39
      %s43 = sphi 0, %s42
      %s59 = sphi 0, %s43
      %s63 = sphi 0, %s63
      %s65 = sphi 0, %s63
      %s66 = sphi 0, %s65
      %s80 = sphi 0, %s66
      %s86 = sphi 0, %s88
      %s89 = sphi 0, %s86
      %s90 = sphi 0, %s89
      %s106 = sphi 0, %s90
      %s112 = sphi 0, %s114
      %s115 = sphi 0, %s112
      %s116 = sphi 0, %s115
      %s132 = sphi 0, %s116
      %s138 = sphi 0, %s140
      %s141 = sphi 0, %s138
      %s142 = sphi 0, %s141
      %s158 = sphi 0, %s142
      %s164 = sphi 0, %s166
      %s167 = sphi 0, %s164
      %s168 = sphi 0, %s167
      %s184 = sphi 0, %s168
      %s188 = sphi 0, %s188
      %s190 = sphi 0, %s188
      %s191 = sphi 0, %s190
      %s205 = sphi 0, %s191
    $region4: #{tpu_custom_call.1} parent=1 // loop_header_branch
      %20 = sbr.rel (%p18) target = $region8
    $region5: #{tpu_custom_call.1} parent=1 // loop_body
      %s22 = ssub.s32 %s17, 1
      %s23 = ssub.s32 %s17, 2
      %s30 = sadd.s32 1, %s25
      %p31 = scmp.ge.s32.totalorder %s30, 2
      %s32 = scalar_select %p31, 0, %s30
      %s33 = sadd.s32 1, %s24
      %s34 = scalar_select %p31, %s33, %s24
      %p35 = scmp.ge.s32.totalorder %s34, 3
      %s36 = scalar_select %p35, 0, %s34
      %s37 = ssub.s32 %s25, %s32
      %p38 = scmp.eq.s32.totalorder %s37, 0
      %s40 = sadd.s32 %s39, 1
      %s41 = scalar_select %p38, %s39, %s40
      %p44 = pneg %p38
      %p45 = scmp.eq.s32.totalorder %s17, 5
      %p46 = por %p44, %p45
      %p47 = scmp.ne.s32.totalorder %s39, %s42
      %p48 = scmp.eq.s32.totalorder %s17, 0
      %p49 = por %p47, %p48
      %p50 = scmp.ne.s32.totalorder %s39, %s42
      %p51 = scmp.eq.s32.totalorder %s22, 5
      %p52 = por %p50, %p51
      %p53 = scmp.ne.s32.totalorder %s42, %s43
      %p54 = scmp.eq.s32.totalorder %s22, 0
      %p55 = por %p53, %p54
      %p56 = scmp.ne.s32.totalorder %s42, %s43
      %p57 = scmp.eq.s32.totalorder %s23, 5
      %p58 = por %p56, %p57
      %p60 = scmp.ne.s32.totalorder %s43, %s59
      %p61 = scmp.eq.s32.totalorder %s23, 0
      %p62 = por %p60, %p61
      %s64 = sadd.s32 %s63, 1
      %p67 = scmp.eq.s32.totalorder %s17, 5
      %p68 = scmp.ne.s32.totalorder %s63, %s65
      %p69 = scmp.eq.s32.totalorder %s17, 0
      %p70 = por %p68, %p69
      %p71 = scmp.ne.s32.totalorder %s63, %s65
      %p72 = scmp.eq.s32.totalorder %s22, 5
      %p73 = por %p71, %p72
      %p74 = scmp.ne.s32.totalorder %s65, %s66
      %p75 = scmp.eq.s32.totalorder %s22, 0
      %p76 = por %p74, %p75
      %p77 = scmp.ne.s32.totalorder %s65, %s66
      %p78 = scmp.eq.s32.totalorder %s23, 5
      %p79 = por %p77, %p78
      %p81 = scmp.ne.s32.totalorder %s66, %s80
      %p82 = scmp.eq.s32.totalorder %s23, 0
      %p83 = por %p81, %p82
      %s84 = ssub.s32 %s24, %s36
      %p85 = scmp.eq.s32.totalorder %s84, 0
      %s87 = sadd.s32 %s86, 1
      %s88 = scalar_select %p85, %s86, %s87
      %p91 = pneg %p85
      %p92 = scmp.eq.s32.totalorder %s17, 5
      %p93 = por %p91, %p92
      %p94 = scmp.ne.s32.totalorder %s86, %s89
      %p95 = scmp.eq.s32.totalorder %s17, 0
      %p96 = por %p94, %p95
      %p97 = scmp.ne.s32.totalorder %s86, %s89
      %p98 = scmp.eq.s32.totalorder %s22, 5
      %p99 = por %p97, %p98
      %p100 = scmp.ne.s32.totalorder %s89, %s90
      %p101 = scmp.eq.s32.totalorder %s22, 0
      %p102 = por %p100, %p101
      %p103 = scmp.ne.s32.totalorder %s89, %s90
      %p104 = scmp.eq.s32.totalorder %s23, 5
      %p105 = por %p103, %p104
      %p107 = scmp.ne.s32.totalorder %s90, %s106
      %p108 = scmp.eq.s32.totalorder %s23, 0
      %p109 = por %p107, %p108
      %s110 = ssub.s32 %s24, %s36
      %p111 = scmp.eq.s32.totalorder %s110, 0
      %s113 = sadd.s32 %s112, 1
      %s114 = scalar_select %p111, %s112, %s113
      %p117 = pneg %p111
      %p118 = scmp.eq.s32.totalorder %s17, 5
      %p119 = por %p117, %p118
      %p120 = scmp.ne.s32.totalorder %s112, %s115
      %p121 = scmp.eq.s32.totalorder %s17, 0
      %p122 = por %p120, %p121
      %p123 = scmp.ne.s32.totalorder %s112, %s115
      %p124 = scmp.eq.s32.totalorder %s22, 5
      %p125 = por %p123, %p124
      %p126 = scmp.ne.s32.totalorder %s115, %s116
      %p127 = scmp.eq.s32.totalorder %s22, 0
      %p128 = por %p126, %p127
      %p129 = scmp.ne.s32.totalorder %s115, %s116
      %p130 = scmp.eq.s32.totalorder %s23, 5
      %p131 = por %p129, %p130
      %p133 = scmp.ne.s32.totalorder %s116, %s132
      %p134 = scmp.eq.s32.totalorder %s23, 0
      %p135 = por %p133, %p134
      %s136 = ssub.s32 %s24, %s36
      %p137 = scmp.eq.s32.totalorder %s136, 0
      %s139 = sadd.s32 %s138, 1
      %s140 = scalar_select %p137, %s138, %s139
      %p143 = pneg %p137
      %p144 = scmp.eq.s32.totalorder %s17, 5
      %p145 = por %p143, %p144
      %p146 = scmp.ne.s32.totalorder %s138, %s141
      %p147 = scmp.eq.s32.totalorder %s17, 0
      %p148 = por %p146, %p147
      %p149 = scmp.ne.s32.totalorder %s138, %s141
      %p150 = scmp.eq.s32.totalorder %s22, 5
      %p151 = por %p149, %p150
      %p152 = scmp.ne.s32.totalorder %s141, %s142
      %p153 = scmp.eq.s32.totalorder %s22, 0
      %p154 = por %p152, %p153
      %p155 = scmp.ne.s32.totalorder %s141, %s142
      %p156 = scmp.eq.s32.totalorder %s23, 5
      %p157 = por %p155, %p156
      %p159 = scmp.ne.s32.totalorder %s142, %s158
      %p160 = scmp.eq.s32.totalorder %s23, 0
      %p161 = por %p159, %p160
      %s162 = ssub.s32 %s24, %s36
      %p163 = scmp.eq.s32.totalorder %s162, 0
      %s165 = sadd.s32 %s164, 1
      %s166 = scalar_select %p163, %s164, %s165
      %p169 = pneg %p163
      %p170 = scmp.eq.s32.totalorder %s17, 5
      %p171 = por %p169, %p170
      %p172 = scmp.ne.s32.totalorder %s164, %s167
      %p173 = scmp.eq.s32.totalorder %s17, 0
      %p174 = por %p172, %p173
      %p175 = scmp.ne.s32.totalorder %s164, %s167
      %p176 = scmp.eq.s32.totalorder %s22, 5
      %p177 = por %p175, %p176
      %p178 = scmp.ne.s32.totalorder %s167, %s168
      %p179 = scmp.eq.s32.totalorder %s22, 0
      %p180 = por %p178, %p179
      %p181 = scmp.ne.s32.totalorder %s167, %s168
      %p182 = scmp.eq.s32.totalorder %s23, 5
      %p183 = por %p181, %p182
      %p185 = scmp.ne.s32.totalorder %s168, %s184
      %p186 = scmp.eq.s32.totalorder %s23, 0
      %p187 = por %p185, %p186
      %s189 = sadd.s32 %s188, 1
      %p192 = scmp.eq.s32.totalorder %s17, 5
      %p193 = scmp.ne.s32.totalorder %s188, %s190
      %p194 = scmp.eq.s32.totalorder %s17, 0
      %p195 = por %p193, %p194
      %p196 = scmp.ne.s32.totalorder %s188, %s190
      %p197 = scmp.eq.s32.totalorder %s22, 5
      %p198 = por %p196, %p197
      %p199 = scmp.ne.s32.totalorder %s190, %s191
      %p200 = scmp.eq.s32.totalorder %s22, 0
      %p201 = por %p199, %p200
      %p202 = scmp.ne.s32.totalorder %s190, %s191
      %p203 = scmp.eq.s32.totalorder %s23, 5
      %p204 = por %p202, %p203
      %p206 = scmp.ne.s32.totalorder %s191, %s205
      %p207 = scmp.eq.s32.totalorder %s23, 0
      %p208 = por %p206, %p207
      %p209 = scmp.le.s32.totalorder 1, %s17
      %p210 = scmp.lt.s32.totalorder %s17, 7
      %p211 = pnand %p209, %p210
      %p212 = pneg %p211
      // Predicated region
      $region9: #{tpu_custom_call.1} parent=5 // pred_check
        _
      $region10: #{tpu_custom_call.1} parent=5 // pred_check_branch
        %214 = sbr.rel (%p211) target = $region12
      $region11: #{tpu_custom_call.1} parent=5 // pred_region
        %s215 = ssub.s32 %s17, 1
        // Predicated region
        $region13: #{tpu_custom_call.1} parent=11 // pred_check
          %p216 = pneg %p76
        $region14: #{tpu_custom_call.1} parent=11 // pred_check_branch
          %218 = sbr.rel (%p216) target = $region16
        $region15: #{tpu_custom_call.1} parent=11 // pred_region
          %220 = vsyncadd [#allocation8], 0
          %s221 = sshll.u32 %s1, 4
          %s222 = int_to_ptr.hbm [resolvable:$true] %s221
          %s223 = sshll.u32 [#allocation7], 4
          %s224 = int_to_ptr.vmem [resolvable:$true] %s223
          %229 = dma.hbm_to_vmem [thread:$0]  %s222, 2048, %s224, [#allocation8], 64, 64, 4
        $region16: #{tpu_custom_call.1} parent=11 // pred_fallthru
          _
      $region12: #{tpu_custom_call.1} parent=5 // pred_fallthru
        _
      %p230 = scmp.lt.s32.totalorder %s17, 6
      // Predicated region
      $region17: #{tpu_custom_call.1} parent=5 // pred_check
        %p231 = pneg %p230
      $region18: #{tpu_custom_call.1} parent=5 // pred_check_branch
        %233 = sbr.rel (%p231) target = $region20
      $region19: #{tpu_custom_call.1} parent=5 // pred_region
        // Predicated region
        $region21: #{tpu_custom_call.1} parent=19 // pred_check
          %p234 = pneg %p49
        $region22: #{tpu_custom_call.1} parent=19 // pred_check_branch
          %236 = sbr.rel (%p234) target = $region24
        $region23: #{tpu_custom_call.1} parent=19 // pred_region
          %s237 = sand.u32 %s17, 1
          %s238 = scalar_lea.sflag [#allocation5], %s237
          %s239 = sand.u32 %s39, 1
          %s240 = smul.addr %s239, 128
          %s241 = scalar_lea.vmem [#allocation4], %s240
          %s242 = smul.u32 16, %s25
          %244 = vsyncadd %s238, 0
          %s245 = smul.addr %s242, 2
          %s246 = smul.addr %s245, 4
          %s247 = scalar_lea.hbm %s0, %s246
          %s248 = sshll.u32 %s247, 4
          %s249 = int_to_ptr.hbm [resolvable:$true] %s248
          %s250 = sshll.u32 %s241, 4
          %s251 = int_to_ptr.vmem [resolvable:$true] %s250
          %256 = dma.hbm_to_vmem [thread:$0]  %s249, 2048, %s251, %s238, 128, 128, 8
        $region24: #{tpu_custom_call.1} parent=19 // pred_fallthru
          _
        // Predicated region
        $region25: #{tpu_custom_call.1} parent=19 // pred_check
          %p257 = pneg %p96
        $region26: #{tpu_custom_call.1} parent=19 // pred_check_branch
          %259 = sbr.rel (%p257) target = $region28
        $region27: #{tpu_custom_call.1} parent=19 // pred_region
          %s260 = sand.u32 %s17, 1
          %s261 = scalar_lea.sflag [#allocation5], %s260
          %s262 = sand.u32 %s86, 1
          %s263 = smul.addr %s262, 128
          %s264 = scalar_lea.vmem [#allocation9], %s263
          %266 = vsyncadd %s261, 0
          %s267 = smul.addr %s24, 16
          %s268 = smul.addr %s267, 8
          %s269 = scalar_lea.hbm %s2, %s268
          %s270 = sshll.u32 %s269, 4
          %s271 = int_to_ptr.hbm [resolvable:$true] %s270
          %s272 = sshll.u32 %s264, 4
          %s273 = int_to_ptr.vmem [resolvable:$true] %s272
          %278 = dma.hbm_to_vmem [thread:$0]  %s271, 2048, %s273, %s261, 128, 128, 8
        $region28: #{tpu_custom_call.1} parent=19 // pred_fallthru
          _
        // Predicated region
        $region29: #{tpu_custom_call.1} parent=19 // pred_check
          %p279 = pneg %p122
        $region30: #{tpu_custom_call.1} parent=19 // pred_check_branch
          %281 = sbr.rel (%p279) target = $region32
        $region31: #{tpu_custom_call.1} parent=19 // pred_region
          %s282 = sand.u32 %s17, 1
          %s283 = scalar_lea.sflag [#allocation5], %s282
          %s284 = sand.u32 %s112, 1
          %s285 = scalar_lea.vmem [#allocation10], %s284
          %287 = vsyncadd %s283, 0
          %s288 = scalar_lea.hbm %s3, %s24
          %s290 = sshll.u32 %s288, 4
          %s291 = int_to_ptr.hbm [resolvable:$true] %s290
          %s292 = sshll.u32 %s285, 4
          %s293 = int_to_ptr.vmem [resolvable:$true] %s292
          %295 = dma.hbm_to_vmem [thread:$0]  %s291, 16, %s293, %s283
        $region32: #{tpu_custom_call.1} parent=19 // pred_fallthru
          _
        // Predicated region
        $region33: #{tpu_custom_call.1} parent=19 // pred_check
          %p296 = pneg %p148
        $region34: #{tpu_custom_call.1} parent=19 // pred_check_branch
          %298 = sbr.rel (%p296) target = $region36
        $region35: #{tpu_custom_call.1} parent=19 // pred_region
          %p299 = scmp.lt.s32.totalorder %s24, 2
          %s300 = scalar_select %p299, %s24, 2
          %s301 = scalar_lea.vmem %s4, %s300
        $region36: #{tpu_custom_call.1} parent=19 // pred_fallthru
          _
        // Predicated region
        $region37: #{tpu_custom_call.1} parent=19 // pred_check
          %p302 = pneg %p174
        $region38: #{tpu_custom_call.1} parent=19 // pred_check_branch
          %304 = sbr.rel (%p302) target = $region40
        $region39: #{tpu_custom_call.1} parent=19 // pred_region
          %s305 = sand.u32 %s17, 1
          %s306 = scalar_lea.sflag [#allocation5], %s305
          %s307 = sand.u32 %s164, 1
          %s308 = scalar_lea.vmem [#allocation11], %s307
          %310 = vsyncadd %s306, 0
          %s311 = scalar_lea.hbm %s5, %s24
          %s313 = sshll.u32 %s311, 4
          %s314 = int_to_ptr.hbm [resolvable:$true] %s313
          %s315 = sshll.u32 %s308, 4
          %s316 = int_to_ptr.vmem [resolvable:$true] %s315
          %318 = dma.hbm_to_vmem [thread:$0]  %s314, 16, %s316, %s306
        $region40: #{tpu_custom_call.1} parent=19 // pred_fallthru
          _
      $region20: #{tpu_custom_call.1} parent=5 // pred_fallthru
        _
      %p319 = scmp.le.s32.totalorder 1, %s17
      %p320 = scmp.lt.s32.totalorder %s17, 7
      %p321 = pnand %p319, %p320
      %p322 = pneg %p321
      // Predicated region
      $region41: #{tpu_custom_call.1} parent=5 // pred_check
        _
      $region42: #{tpu_custom_call.1} parent=5 // pred_check_branch
        %324 = sbr.rel (%p321) target = $region44
      $region43: #{tpu_custom_call.1} parent=5 // pred_region
        %s325 = ssub.s32 %s17, 1
        %s326 = sand.u32 %s22, 1
        %s327 = scalar_lea.sflag [#allocation5], %s326
        %s328 = sand.u32 %s42, 1
        %s329 = smul.addr %s328, 128
        %s330 = scalar_lea.vmem [#allocation4], %s329
        // Predicated region
        $region45: #{tpu_custom_call.1} parent=43 // pred_check
          %p331 = pneg %p55
        $region46: #{tpu_custom_call.1} parent=43 // pred_check_branch
          %333 = sbr.rel (%p331) target = $region48
        $region47: #{tpu_custom_call.1} parent=43 // pred_region
          %335 = dma.done %s327, 2048
        $region48: #{tpu_custom_call.1} parent=43 // pred_fallthru
          _
        // Predicated region
        $region49: #{tpu_custom_call.1} parent=43 // pred_check
          %p336 = pneg %p76
        $region50: #{tpu_custom_call.1} parent=43 // pred_check_branch
          %338 = sbr.rel (%p336) target = $region52
        $region51: #{tpu_custom_call.1} parent=43 // pred_region
          %340 = dma.done [#allocation8], 2048
        $region52: #{tpu_custom_call.1} parent=43 // pred_fallthru
          _
        %s341 = sand.u32 %s22, 1
        %s342 = scalar_lea.sflag [#allocation5], %s341
        %s343 = sand.u32 %s89, 1
        %s344 = smul.addr %s343, 128
        %s345 = scalar_lea.vmem [#allocation9], %s344
        // Predicated region
        $region53: #{tpu_custom_call.1} parent=43 // pred_check
          %p346 = pneg %p102
        $region54: #{tpu_custom_call.1} parent=43 // pred_check_branch
          %348 = sbr.rel (%p346) target = $region56
        $region55: #{tpu_custom_call.1} parent=43 // pred_region
          %350 = dma.done %s342, 2048
        $region56: #{tpu_custom_call.1} parent=43 // pred_fallthru
          _
        %s351 = sand.u32 %s22, 1
        %s352 = scalar_lea.sflag [#allocation5], %s351
        %s353 = sand.u32 %s115, 1
        %s354 = scalar_lea.vmem [#allocation10], %s353
        // Predicated region
        $region57: #{tpu_custom_call.1} parent=43 // pred_check
          %p355 = pneg %p128
        $region58: #{tpu_custom_call.1} parent=43 // pred_check_branch
          %357 = sbr.rel (%p355) target = $region60
        $region59: #{tpu_custom_call.1} parent=43 // pred_region
          %359 = dma.done %s352, 16
        $region60: #{tpu_custom_call.1} parent=43 // pred_fallthru
          _
        %s360 = sand.u32 %s22, 1
        %s361 = scalar_lea.sflag [#allocation5], %s360
        %s362 = sand.u32 %s167, 1
        %s363 = scalar_lea.vmem [#allocation11], %s362
        // Predicated region
        $region61: #{tpu_custom_call.1} parent=43 // pred_check
          %p364 = pneg %p180
        $region62: #{tpu_custom_call.1} parent=43 // pred_check_branch
          %366 = sbr.rel (%p364) target = $region64
        $region63: #{tpu_custom_call.1} parent=43 // pred_region
          %368 = dma.done %s361, 16
        $region64: #{tpu_custom_call.1} parent=43 // pred_fallthru
          _
        %s369 = sand.u32 %s22, 1
        %s370 = scalar_lea.sflag [#allocation5], %s369
        %s371 = sand.u32 %s42, 1
        %s372 = smul.addr %s371, 128
        %s373 = scalar_lea.vmem [#allocation4], %s372
        %p374 = pneg %p55
        %p375 = pneg %p52
        %p376 = pneg %p76
        %p377 = pneg %p73
        %s378 = sand.u32 %s22, 1
        %s379 = scalar_lea.sflag [#allocation5], %s378
        %s380 = sand.u32 %s89, 1
        %s381 = smul.addr %s380, 128
        %s382 = scalar_lea.vmem [#allocation9], %s381
        %p383 = pneg %p102
        %p384 = pneg %p99
        %s385 = sand.u32 %s22, 1
        %s386 = scalar_lea.sflag [#allocation5], %s385
        %s387 = sand.u32 %s115, 1
        %s388 = scalar_lea.vmem [#allocation10], %s387
        %p389 = pneg %p128
        %p390 = pneg %p125
        %p391 = scmp.lt.s32.totalorder %s26, 2
        %s392 = scalar_select %p391, %s26, 2
        %s393 = scalar_lea.vmem %s4, %s392
        %p394 = pneg %p154
        %p395 = pneg %p151
        %s396 = sand.u32 %s22, 1
        %s397 = scalar_lea.sflag [#allocation5], %s396
        %s398 = sand.u32 %s167, 1
        %s399 = scalar_lea.vmem [#allocation11], %s398
        %p400 = pneg %p180
        %p401 = pneg %p177
        %p402 = pneg %p201
        %p403 = pneg %p198
        %s404 = smul.u32 16, %s27
        %p405 = scmp.lt.s32.totalorder %s26, 2
        %s406 = scalar_select %p405, %s26, 2
        %s407 = scalar_lea.vmem %s4, %s406
        %p408 = scmp.eq.s32.totalorder %s26, 0
        %p409 = scmp.eq.s32.totalorder %s27, 0
        %p410 = pnand %p408, %p409
        %p411 = pneg %p410
        // Predicated region
        $region65: #{tpu_custom_call.1} parent=43 // pred_check
          _
        $region66: #{tpu_custom_call.1} parent=43 // pred_check_branch
          %413 = sbr.rel (%p410) target = $region68
        $region67: #{tpu_custom_call.1} parent=43 // pred_region
          %v414 = vld [vmem:[#allocation7] sm:$0xf]
          %v415 = vld [vmem:[#allocation7 + $0x4] sm:$0xf]
          %v416 = vld [vmem:[#allocation7 + $0x8] sm:$0xf]
          %v417 = vld [vmem:[#allocation7 + $0xc] sm:$0xf]
          %v418 = vld [vmem:[#allocation7 + $0x10] sm:$0xf]
          %v419 = vld [vmem:[#allocation7 + $0x14] sm:$0xf]
          %v420 = vld [vmem:[#allocation7 + $0x18] sm:$0xf]
          %v421 = vld [vmem:[#allocation7 + $0x1c] sm:$0xf]
          %v422 = vld [vmem:[#allocation7 + $0x20] sm:$0xf]
          %v423 = vld [vmem:[#allocation7 + $0x24] sm:$0xf]
          %v424 = vld [vmem:[#allocation7 + $0x28] sm:$0xf]
          %v425 = vld [vmem:[#allocation7 + $0x2c] sm:$0xf]
          %v426 = vld [vmem:[#allocation7 + $0x30] sm:$0xf]
          %v427 = vld [vmem:[#allocation7 + $0x34] sm:$0xf]
          %v428 = vld [vmem:[#allocation7 + $0x38] sm:$0xf]
          %v429 = vld [vmem:[#allocation7 + $0x3c] sm:$0xf]
          %v430 = vld [vmem:[#allocation7 + $0x40] sm:$0xf]
          %v431 = vld [vmem:[#allocation7 + $0x44] sm:$0xf]
          %v432 = vld [vmem:[#allocation7 + $0x48] sm:$0xf]
          %v433 = vld [vmem:[#allocation7 + $0x4c] sm:$0xf]
          %v434 = vld [vmem:[#allocation7 + $0x50] sm:$0xf]
          %v435 = vld [vmem:[#allocation7 + $0x54] sm:$0xf]
          %v436 = vld [vmem:[#allocation7 + $0x58] sm:$0xf]
          %v437 = vld [vmem:[#allocation7 + $0x5c] sm:$0xf]
          %v438 = vld [vmem:[#allocation7 + $0x60] sm:$0xf]
          %v439 = vld [vmem:[#allocation7 + $0x64] sm:$0xf]
          %v440 = vld [vmem:[#allocation7 + $0x68] sm:$0xf]
          %v441 = vld [vmem:[#allocation7 + $0x6c] sm:$0xf]
          %v442 = vld [vmem:[#allocation7 + $0x70] sm:$0xf]
          %v443 = vld [vmem:[#allocation7 + $0x74] sm:$0xf]
          %v444 = vld [vmem:[#allocation7 + $0x78] sm:$0xf]
          %v445 = vld [vmem:[#allocation7 + $0x7c] sm:$0xf]
          %446 = vst [vmem:[#allocation2] sm:$0xf] %v414
          %447 = vst [vmem:[#allocation2 + $0x4] sm:$0xf] %v415
          %448 = vst [vmem:[#allocation2 + $0x8] sm:$0xf] %v416
          %449 = vst [vmem:[#allocation2 + $0xc] sm:$0xf] %v417
          %450 = vst [vmem:[#allocation2 + $0x10] sm:$0xf] %v418
          %451 = vst [vmem:[#allocation2 + $0x14] sm:$0xf] %v419
          %452 = vst [vmem:[#allocation2 + $0x18] sm:$0xf] %v420
          %453 = vst [vmem:[#allocation2 + $0x1c] sm:$0xf] %v421
          %454 = vst [vmem:[#allocation2 + $0x20] sm:$0xf] %v422
          %455 = vst [vmem:[#allocation2 + $0x24] sm:$0xf] %v423
          %456 = vst [vmem:[#allocation2 + $0x28] sm:$0xf] %v424
          %457 = vst [vmem:[#allocation2 + $0x2c] sm:$0xf] %v425
          %458 = vst [vmem:[#allocation2 + $0x30] sm:$0xf] %v426
          %459 = vst [vmem:[#allocation2 + $0x34] sm:$0xf] %v427
          %460 = vst [vmem:[#allocation2 + $0x38] sm:$0xf] %v428
          %461 = vst [vmem:[#allocation2 + $0x3c] sm:$0xf] %v429
          %462 = vst [vmem:[#allocation2 + $0x40] sm:$0xf] %v430
          %463 = vst [vmem:[#allocation2 + $0x44] sm:$0xf] %v431
          %464 = vst [vmem:[#allocation2 + $0x48] sm:$0xf] %v432
          %465 = vst [vmem:[#allocation2 + $0x4c] sm:$0xf] %v433
          %466 = vst [vmem:[#allocation2 + $0x50] sm:$0xf] %v434
          %467 = vst [vmem:[#allocation2 + $0x54] sm:$0xf] %v435
          %468 = vst [vmem:[#allocation2 + $0x58] sm:$0xf] %v436
          %469 = vst [vmem:[#allocation2 + $0x5c] sm:$0xf] %v437
          %470 = vst [vmem:[#allocation2 + $0x60] sm:$0xf] %v438
          %471 = vst [vmem:[#allocation2 + $0x64] sm:$0xf] %v439
          %472 = vst [vmem:[#allocation2 + $0x68] sm:$0xf] %v440
          %473 = vst [vmem:[#allocation2 + $0x6c] sm:$0xf] %v441
          %474 = vst [vmem:[#allocation2 + $0x70] sm:$0xf] %v442
          %475 = vst [vmem:[#allocation2 + $0x74] sm:$0xf] %v443
          %476 = vst [vmem:[#allocation2 + $0x78] sm:$0xf] %v444
          %477 = vst [vmem:[#allocation2 + $0x7c] sm:$0xf] %v445
        $region68: #{tpu_custom_call.1} parent=43 // pred_fallthru
          _
        %v478 = vld [vmem:[%s330] sm:$0xff]
        %v479 = vld [vmem:[%s330 + $0x8] sm:$0xff]
        %v480 = vld [vmem:[%s330 + $0x10] sm:$0xff]
        %v481 = vld [vmem:[%s330 + $0x18] sm:$0xff]
        %v482 = vld [vmem:[%s330 + $0x20] sm:$0xff]
        %v483 = vld [vmem:[%s330 + $0x28] sm:$0xff]
        %v484 = vld [vmem:[%s330 + $0x30] sm:$0xff]
        %v485 = vld [vmem:[%s330 + $0x38] sm:$0xff]
        %v486 = vld [vmem:[%s330 + $0x40] sm:$0xff]
        %v487 = vld [vmem:[%s330 + $0x48] sm:$0xff]
        %v488 = vld [vmem:[%s330 + $0x50] sm:$0xff]
        %v489 = vld [vmem:[%s330 + $0x58] sm:$0xff]
        %v490 = vld [vmem:[%s330 + $0x60] sm:$0xff]
        %v491 = vld [vmem:[%s330 + $0x68] sm:$0xff]
        %v492 = vld [vmem:[%s330 + $0x70] sm:$0xff]
        %v493 = vld [vmem:[%s330 + $0x78] sm:$0xff]
        %v494 = vld [vmem:[#allocation2] sm:$0xf]
        %v495 = vld [vmem:[#allocation2 + $0x4] sm:$0xf]
        %v496 = vld [vmem:[#allocation2 + $0x8] sm:$0xf]
        %v497 = vld [vmem:[#allocation2 + $0xc] sm:$0xf]
        %v498 = vld [vmem:[#allocation2 + $0x10] sm:$0xf]
        %v499 = vld [vmem:[#allocation2 + $0x14] sm:$0xf]
        %v500 = vld [vmem:[#allocation2 + $0x18] sm:$0xf]
        %v501 = vld [vmem:[#allocation2 + $0x1c] sm:$0xf]
        %v502 = vld [vmem:[#allocation2 + $0x20] sm:$0xf]
        %v503 = vld [vmem:[#allocation2 + $0x24] sm:$0xf]
        %v504 = vld [vmem:[#allocation2 + $0x28] sm:$0xf]
        %v505 = vld [vmem:[#allocation2 + $0x2c] sm:$0xf]
        %v506 = vld [vmem:[#allocation2 + $0x30] sm:$0xf]
        %v507 = vld [vmem:[#allocation2 + $0x34] sm:$0xf]
        %v508 = vld [vmem:[#allocation2 + $0x38] sm:$0xf]
        %v509 = vld [vmem:[#allocation2 + $0x3c] sm:$0xf]
        %v510 = vld [vmem:[#allocation2 + $0x40] sm:$0xf]
        %v511 = vld [vmem:[#allocation2 + $0x44] sm:$0xf]
        %v512 = vld [vmem:[#allocation2 + $0x48] sm:$0xf]
        %v513 = vld [vmem:[#allocation2 + $0x4c] sm:$0xf]
        %v514 = vld [vmem:[#allocation2 + $0x50] sm:$0xf]
        %v515 = vld [vmem:[#allocation2 + $0x54] sm:$0xf]
        %v516 = vld [vmem:[#allocation2 + $0x58] sm:$0xf]
        %v517 = vld [vmem:[#allocation2 + $0x5c] sm:$0xf]
        %v518 = vld [vmem:[#allocation2 + $0x60] sm:$0xf]
        %v519 = vld [vmem:[#allocation2 + $0x64] sm:$0xf]
        %v520 = vld [vmem:[#allocation2 + $0x68] sm:$0xf]
        %v521 = vld [vmem:[#allocation2 + $0x6c] sm:$0xf]
        %v522 = vld [vmem:[#allocation2 + $0x70] sm:$0xf]
        %v523 = vld [vmem:[#allocation2 + $0x74] sm:$0xf]
        %v524 = vld [vmem:[#allocation2 + $0x78] sm:$0xf]
        %v525 = vld [vmem:[#allocation2 + $0x7c] sm:$0xf]
        %v542 = vunpack.c.l.b16 %v478
        %v543 = vunpack.c.h.b16 %v478
        %v544 = vunpack.c.l.b16 %v479
        %v545 = vunpack.c.h.b16 %v479
        %v546 = vunpack.c.l.b16 %v480
        %v547 = vunpack.c.h.b16 %v480
        %v548 = vunpack.c.l.b16 %v481
        %v549 = vunpack.c.h.b16 %v481
        %v550 = vunpack.c.l.b16 %v482
        %v551 = vunpack.c.h.b16 %v482
        %v552 = vunpack.c.l.b16 %v483
        %v553 = vunpack.c.h.b16 %v483
        %v554 = vunpack.c.l.b16 %v484
        %v555 = vunpack.c.h.b16 %v484
        %v556 = vunpack.c.l.b16 %v485
        %v557 = vunpack.c.h.b16 %v485
        %v558 = vunpack.c.l.b16 %v486
        %v559 = vunpack.c.h.b16 %v486
        %v560 = vunpack.c.l.b16 %v487
        %v561 = vunpack.c.h.b16 %v487
        %v562 = vunpack.c.l.b16 %v488
        %v563 = vunpack.c.h.b16 %v488
        %v564 = vunpack.c.l.b16 %v489
        %v565 = vunpack.c.h.b16 %v489
        %v566 = vunpack.c.l.b16 %v490
        %v567 = vunpack.c.h.b16 %v490
        %v568 = vunpack.c.l.b16 %v491
        %v569 = vunpack.c.h.b16 %v491
        %v570 = vunpack.c.l.b16 %v492
        %v571 = vunpack.c.h.b16 %v492
        %v572 = vunpack.c.l.b16 %v493
        %v573 = vunpack.c.h.b16 %v493
        %v574 = vpack.c.b16 %v544, %v542
        %v575 = vpack.c.b16 %v545, %v543
        %v576 = vpack.c.b16 %v548, %v546
        %v577 = vpack.c.b16 %v549, %v547
        %v578 = vpack.c.b16 %v552, %v550
        %v579 = vpack.c.b16 %v553, %v551
        %v580 = vpack.c.b16 %v556, %v554
        %v581 = vpack.c.b16 %v557, %v555
        %v582 = vpack.c.b16 %v560, %v558
        %v583 = vpack.c.b16 %v561, %v559
        %v584 = vpack.c.b16 %v564, %v562
        %v585 = vpack.c.b16 %v565, %v563
        %v586 = vpack.c.b16 %v568, %v566
        %v587 = vpack.c.b16 %v569, %v567
        %v588 = vpack.c.b16 %v572, %v570
        %v589 = vpack.c.b16 %v573, %v571
        %v638 = vunpack.c.l.b16 %v494
        %v639 = vunpack.c.l.b16 %v495
        %v640 = vunpack.c.l.b16 %v496
        %v641 = vunpack.c.l.b16 %v497
        %v642 = vunpack.c.l.b16 %v498
        %v643 = vunpack.c.l.b16 %v499
        %v644 = vunpack.c.l.b16 %v500
        %v645 = vunpack.c.l.b16 %v501
        %v646 = vunpack.c.l.b16 %v502
        %v647 = vunpack.c.l.b16 %v503
        %v648 = vunpack.c.l.b16 %v504
        %v649 = vunpack.c.l.b16 %v505
        %v650 = vunpack.c.l.b16 %v506
        %v651 = vunpack.c.l.b16 %v507
        %v652 = vunpack.c.l.b16 %v508
        %v653 = vunpack.c.l.b16 %v509
        %v654 = vunpack.c.l.b16 %v510
        %v655 = vunpack.c.l.b16 %v511
        %v656 = vunpack.c.l.b16 %v512
        %v657 = vunpack.c.l.b16 %v513
        %v658 = vunpack.c.l.b16 %v514
        %v659 = vunpack.c.l.b16 %v515
        %v660 = vunpack.c.l.b16 %v516
        %v661 = vunpack.c.l.b16 %v517
        %v662 = vunpack.c.l.b16 %v518
        %v663 = vunpack.c.l.b16 %v519
        %v664 = vunpack.c.l.b16 %v520
        %v665 = vunpack.c.l.b16 %v521
        %v666 = vunpack.c.l.b16 %v522
        %v667 = vunpack.c.l.b16 %v523
        %v668 = vunpack.c.l.b16 %v524
        %v669 = vunpack.c.l.b16 %v525
        %v670 = vpack.c.b16 %v639, %v638
        %v671 = vpack.c.b16 %v641, %v640
        %v672 = vpack.c.b16 %v643, %v642
        %v673 = vpack.c.b16 %v645, %v644
        %v674 = vpack.c.b16 %v647, %v646
        %v675 = vpack.c.b16 %v649, %v648
        %v676 = vpack.c.b16 %v651, %v650
        %v677 = vpack.c.b16 %v653, %v652
        %v678 = vpack.c.b16 %v655, %v654
        %v679 = vpack.c.b16 %v657, %v656
        %v680 = vpack.c.b16 %v659, %v658
        %v681 = vpack.c.b16 %v661, %v660
        %v682 = vpack.c.b16 %v663, %v662
        %v683 = vpack.c.b16 %v665, %v664
        %v684 = vpack.c.b16 %v667, %v666
        %v685 = vpack.c.b16 %v669, %v668
        %702 = vmatpush.bf16.msra.mxu0 %v677
        %703 = vmatpush.bf16.msra.mxu0 %v676
        %704 = vmatpush.bf16.msra.mxu0 %v675
        %705 = vmatpush.bf16.msra.mxu0 %v674
        %706 = vmatpush.bf16.msra.mxu0 %v673
        %707 = vmatpush.bf16.msra.mxu0 %v672
        %708 = vmatpush.bf16.msra.mxu0 %v671
        %709 = vmatpush.bf16.msra.mxu0 %v670
        %710 = vmatmul.bf16.gmra.mxu0 %v574
        %v711 = vpop.f32.mrf.mxu0
        %v712 = vadd.f32 0.0, %v711
        %v713 = vpop.f32.mrf.mxu0
        %v714 = vadd.f32 0.0, %v713
        %715 = vmatmul.bf16.gmra.mxu0 %v576
        %v716 = vpop.f32.mrf.mxu0
        %v717 = vadd.f32 0.0, %v716
        %v718 = vpop.f32.mrf.mxu0
        %v719 = vadd.f32 0.0, %v718
        %720 = vmatmul.bf16.gmra.mxu0 %v578
        %v721 = vpop.f32.mrf.mxu0
        %v722 = vadd.f32 0.0, %v721
        %v723 = vpop.f32.mrf.mxu0
        %v724 = vadd.f32 0.0, %v723
        %725 = vmatmul.bf16.gmra.mxu0 %v580
        %v726 = vpop.f32.mrf.mxu0
        %v727 = vadd.f32 0.0, %v726
        %v728 = vpop.f32.mrf.mxu0
        %v729 = vadd.f32 0.0, %v728
        %730 = vmatmul.bf16.gmra.mxu0 %v582
        %v731 = vpop.f32.mrf.mxu0
        %v732 = vadd.f32 0.0, %v731
        %v733 = vpop.f32.mrf.mxu0
        %v734 = vadd.f32 0.0, %v733
        %735 = vmatmul.bf16.gmra.mxu0 %v584
        %v736 = vpop.f32.mrf.mxu0
        %v737 = vadd.f32 0.0, %v736
        %v738 = vpop.f32.mrf.mxu0
        %v739 = vadd.f32 0.0, %v738
        %740 = vmatmul.bf16.gmra.mxu0 %v586
        %v741 = vpop.f32.mrf.mxu0
        %v742 = vadd.f32 0.0, %v741
        %v743 = vpop.f32.mrf.mxu0
        %v744 = vadd.f32 0.0, %v743
        %745 = vmatmul.bf16.gmra.mxu0 %v588
        %v746 = vpop.f32.mrf.mxu0
        %v747 = vadd.f32 0.0, %v746
        %v748 = vpop.f32.mrf.mxu0
        %v749 = vadd.f32 0.0, %v748
        %750 = vdwg.mxu0
        %751 = vmatpush.bf16.msra.mxu0 %v685
        %752 = vmatpush.bf16.msra.mxu0 %v684
        %753 = vmatpush.bf16.msra.mxu0 %v683
        %754 = vmatpush.bf16.msra.mxu0 %v682
        %755 = vmatpush.bf16.msra.mxu0 %v681
        %756 = vmatpush.bf16.msra.mxu0 %v680
        %757 = vmatpush.bf16.msra.mxu0 %v679
        %758 = vmatpush.bf16.msra.mxu0 %v678
        %759 = vmatmul.bf16.gmra.mxu0 %v575
        %v760 = vpop.f32.mrf.mxu0
        %v761 = vadd.f32 %v712, %v760
        %v762 = vpop.f32.mrf.mxu0
        %v763 = vadd.f32 %v714, %v762
        %764 = vmatmul.bf16.gmra.mxu0 %v577
        %v765 = vpop.f32.mrf.mxu0
        %v766 = vadd.f32 %v717, %v765
        %v767 = vpop.f32.mrf.mxu0
        %v768 = vadd.f32 %v719, %v767
        %769 = vmatmul.bf16.gmra.mxu0 %v579
        %v770 = vpop.f32.mrf.mxu0
        %v771 = vadd.f32 %v722, %v770
        %v772 = vpop.f32.mrf.mxu0
        %v773 = vadd.f32 %v724, %v772
        %774 = vmatmul.bf16.gmra.mxu0 %v581
        %v775 = vpop.f32.mrf.mxu0
        %v776 = vadd.f32 %v727, %v775
        %v777 = vpop.f32.mrf.mxu0
        %v778 = vadd.f32 %v729, %v777
        %779 = vmatmul.bf16.gmra.mxu0 %v583
        %v780 = vpop.f32.mrf.mxu0
        %v781 = vadd.f32 %v732, %v780
        %v782 = vpop.f32.mrf.mxu0
        %v783 = vadd.f32 %v734, %v782
        %784 = vmatmul.bf16.gmra.mxu0 %v585
        %v785 = vpop.f32.mrf.mxu0
        %v786 = vadd.f32 %v737, %v785
        %v787 = vpop.f32.mrf.mxu0
        %v788 = vadd.f32 %v739, %v787
        %789 = vmatmul.bf16.gmra.mxu0 %v587
        %v790 = vpop.f32.mrf.mxu0
        %v791 = vadd.f32 %v742, %v790
        %v792 = vpop.f32.mrf.mxu0
        %v793 = vadd.f32 %v744, %v792
        %794 = vmatmul.bf16.gmra.mxu0 %v589
        %v795 = vpop.f32.mrf.mxu0
        %v796 = vadd.f32 %v747, %v795
        %v797 = vpop.f32.mrf.mxu0
        %v798 = vadd.f32 %v749, %v797
        %799 = vdwg.mxu0
        %v800 = vld [vmem:[%s345] sm:$0xff]
        %v801 = vld [vmem:[%s345 + $0x8] sm:$0xff]
        %v802 = vld [vmem:[%s345 + $0x10] sm:$0xff]
        %v803 = vld [vmem:[%s345 + $0x18] sm:$0xff]
        %v804 = vld [vmem:[%s345 + $0x20] sm:$0xff]
        %v805 = vld [vmem:[%s345 + $0x28] sm:$0xff]
        %v806 = vld [vmem:[%s345 + $0x30] sm:$0xff]
        %v807 = vld [vmem:[%s345 + $0x38] sm:$0xff]
        %v808 = vld [vmem:[%s345 + $0x40] sm:$0xff]
        %v809 = vld [vmem:[%s345 + $0x48] sm:$0xff]
        %v810 = vld [vmem:[%s345 + $0x50] sm:$0xff]
        %v811 = vld [vmem:[%s345 + $0x58] sm:$0xff]
        %v812 = vld [vmem:[%s345 + $0x60] sm:$0xff]
        %v813 = vld [vmem:[%s345 + $0x68] sm:$0xff]
        %v814 = vld [vmem:[%s345 + $0x70] sm:$0xff]
        %v815 = vld [vmem:[%s345 + $0x78] sm:$0xff]
        %v816 = vld [vmem:[%s354] sm:$0x1]
        %v818 = vperm.slane %v816, 0
        %820 = vmatpush.msra.mxu0 %v815
        %821 = vmatpush.msra.mxu0 %v814
        %822 = vmatpush.msra.mxu0 %v813
        %823 = vmatpush.msra.mxu0 %v812
        %824 = vmatpush.msra.mxu0 %v811
        %825 = vmatpush.msra.mxu0 %v810
        %826 = vmatpush.msra.mxu0 %v809
        %827 = vmatpush.msra.mxu0 %v808
        %828 = vmatpush.msra.mxu0 %v807
        %829 = vmatpush.msra.mxu0 %v806
        %830 = vmatpush.msra.mxu0 %v805
        %831 = vmatpush.msra.mxu0 %v804
        %832 = vmatpush.msra.mxu0 %v803
        %833 = vmatpush.msra.mxu0 %v802
        %834 = vmatpush.msra.mxu0 %v801
        %835 = vmatpush.msra.mxu0 %v800
        %836 = vmatmul.f32.gmra.mxu0 %v761
        %v837 = vpop.f32.mrf.mxu0
        %v838 = vadd.f32 %v818, %v837
        %839 = vmatmul.f32.gmra.mxu0 %v763
        %v840 = vpop.f32.mrf.mxu0
        %v841 = vadd.f32 %v818, %v840
        %842 = vmatmul.f32.gmra.mxu0 %v766
        %v843 = vpop.f32.mrf.mxu0
        %v844 = vadd.f32 %v818, %v843
        %845 = vmatmul.f32.gmra.mxu0 %v768
        %v846 = vpop.f32.mrf.mxu0
        %v847 = vadd.f32 %v818, %v846
        %848 = vmatmul.f32.gmra.mxu0 %v771
        %v849 = vpop.f32.mrf.mxu0
        %v850 = vadd.f32 %v818, %v849
        %851 = vmatmul.f32.gmra.mxu0 %v773
        %v852 = vpop.f32.mrf.mxu0
        %v853 = vadd.f32 %v818, %v852
        %854 = vmatmul.f32.gmra.mxu0 %v776
        %v855 = vpop.f32.mrf.mxu0
        %v856 = vadd.f32 %v818, %v855
        %857 = vmatmul.f32.gmra.mxu0 %v778
        %v858 = vpop.f32.mrf.mxu0
        %v859 = vadd.f32 %v818, %v858
        %860 = vmatmul.f32.gmra.mxu0 %v781
        %v861 = vpop.f32.mrf.mxu0
        %v862 = vadd.f32 %v818, %v861
        %863 = vmatmul.f32.gmra.mxu0 %v783
        %v864 = vpop.f32.mrf.mxu0
        %v865 = vadd.f32 %v818, %v864
        %866 = vmatmul.f32.gmra.mxu0 %v786
        %v867 = vpop.f32.mrf.mxu0
        %v868 = vadd.f32 %v818, %v867
        %869 = vmatmul.f32.gmra.mxu0 %v788
        %v870 = vpop.f32.mrf.mxu0
        %v871 = vadd.f32 %v818, %v870
        %872 = vmatmul.f32.gmra.mxu0 %v791
        %v873 = vpop.f32.mrf.mxu0
        %v874 = vadd.f32 %v818, %v873
        %875 = vmatmul.f32.gmra.mxu0 %v793
        %v876 = vpop.f32.mrf.mxu0
        %v877 = vadd.f32 %v818, %v876
        %878 = vmatmul.f32.gmra.mxu0 %v796
        %v879 = vpop.f32.mrf.mxu0
        %v880 = vadd.f32 %v818, %v879
        %881 = vmatmul.f32.gmra.mxu0 %v798
        %v882 = vpop.f32.mrf.mxu0
        %v883 = vadd.f32 %v818, %v882
        %884 = vdwg.mxu0
        %s885 = smul.u32 %s27, 128
        %s886 = scalar_lea.vmem [#allocation3], %s885
        %887 = vst [vmem:[%s886] sm:$0xff] %v838
        %888 = vst [vmem:[%s886 + $0x8] sm:$0xff] %v841
        %889 = vst [vmem:[%s886 + $0x10] sm:$0xff] %v844
        %890 = vst [vmem:[%s886 + $0x18] sm:$0xff] %v847
        %891 = vst [vmem:[%s886 + $0x20] sm:$0xff] %v850
        %892 = vst [vmem:[%s886 + $0x28] sm:$0xff] %v853
        %893 = vst [vmem:[%s886 + $0x30] sm:$0xff] %v856
        %894 = vst [vmem:[%s886 + $0x38] sm:$0xff] %v859
        %895 = vst [vmem:[%s886 + $0x40] sm:$0xff] %v862
        %896 = vst [vmem:[%s886 + $0x48] sm:$0xff] %v865
        %897 = vst [vmem:[%s886 + $0x50] sm:$0xff] %v868
        %898 = vst [vmem:[%s886 + $0x58] sm:$0xff] %v871
        %899 = vst [vmem:[%s886 + $0x60] sm:$0xff] %v874
        %900 = vst [vmem:[%s886 + $0x68] sm:$0xff] %v877
        %901 = vst [vmem:[%s886 + $0x70] sm:$0xff] %v880
        %902 = vst [vmem:[%s886 + $0x78] sm:$0xff] %v883
        %p903 = scmp.eq.s32.totalorder %s27, 1
        // Predicated region
        $region69: #{tpu_custom_call.1} parent=43 // pred_check
          %p904 = pneg %p903
        $region70: #{tpu_custom_call.1} parent=43 // pred_check_branch
          %906 = sbr.rel (%p904) target = $region72
        $region71: #{tpu_custom_call.1} parent=43 // pred_region
          %v907 = vld [vmem:[#allocation3] sm:$0xff]
          %v908 = vld [vmem:[#allocation3 + $0x8] sm:$0xff]
          %v909 = vld [vmem:[#allocation3 + $0x10] sm:$0xff]
          %v910 = vld [vmem:[#allocation3 + $0x18] sm:$0xff]
          %v911 = vld [vmem:[#allocation3 + $0x20] sm:$0xff]
          %v912 = vld [vmem:[#allocation3 + $0x28] sm:$0xff]
          %v913 = vld [vmem:[#allocation3 + $0x30] sm:$0xff]
          %v914 = vld [vmem:[#allocation3 + $0x38] sm:$0xff]
          %v915 = vld [vmem:[#allocation3 + $0x40] sm:$0xff]
          %v916 = vld [vmem:[#allocation3 + $0x48] sm:$0xff]
          %v917 = vld [vmem:[#allocation3 + $0x50] sm:$0xff]
          %v918 = vld [vmem:[#allocation3 + $0x58] sm:$0xff]
          %v919 = vld [vmem:[#allocation3 + $0x60] sm:$0xff]
          %v920 = vld [vmem:[#allocation3 + $0x68] sm:$0xff]
          %v921 = vld [vmem:[#allocation3 + $0x70] sm:$0xff]
          %v922 = vld [vmem:[#allocation3 + $0x78] sm:$0xff]
          %v923 = vld [vmem:[#allocation3 + $0x80] sm:$0xff]
          %v924 = vld [vmem:[#allocation3 + $0x88] sm:$0xff]
          %v925 = vld [vmem:[#allocation3 + $0x90] sm:$0xff]
          %v926 = vld [vmem:[#allocation3 + $0x98] sm:$0xff]
          %v927 = vld [vmem:[#allocation3 + $0xa0] sm:$0xff]
          %v928 = vld [vmem:[#allocation3 + $0xa8] sm:$0xff]
          %v929 = vld [vmem:[#allocation3 + $0xb0] sm:$0xff]
          %v930 = vld [vmem:[#allocation3 + $0xb8] sm:$0xff]
          %v931 = vld [vmem:[#allocation3 + $0xc0] sm:$0xff]
          %v932 = vld [vmem:[#allocation3 + $0xc8] sm:$0xff]
          %v933 = vld [vmem:[#allocation3 + $0xd0] sm:$0xff]
          %v934 = vld [vmem:[#allocation3 + $0xd8] sm:$0xff]
          %v935 = vld [vmem:[#allocation3 + $0xe0] sm:$0xff]
          %v936 = vld [vmem:[#allocation3 + $0xe8] sm:$0xff]
          %v937 = vld [vmem:[#allocation3 + $0xf0] sm:$0xff]
          %v938 = vld [vmem:[#allocation3 + $0xf8] sm:$0xff]
          %v939 = vadd.f32 %v907, %v908
          %v940 = vadd.f32 %v939, %v909
          %v941 = vadd.f32 %v940, %v910
          %v942 = vadd.f32 %v941, %v911
          %v943 = vadd.f32 %v942, %v912
          %v944 = vadd.f32 %v943, %v913
          %v945 = vadd.f32 %v944, %v914
          %v946 = vadd.f32 %v945, %v915
          %v947 = vadd.f32 %v946, %v916
          %v948 = vadd.f32 %v947, %v917
          %v949 = vadd.f32 %v948, %v918
          %v950 = vadd.f32 %v949, %v919
          %v951 = vadd.f32 %v950, %v920
          %v952 = vadd.f32 %v951, %v921
          %v953 = vadd.f32 %v952, %v922
          %v954 = vadd.f32 %v953, %v923
          %v955 = vadd.f32 %v954, %v924
          %v956 = vadd.f32 %v955, %v925
          %v957 = vadd.f32 %v956, %v926
          %v958 = vadd.f32 %v957, %v927
          %v959 = vadd.f32 %v958, %v928
          %v960 = vadd.f32 %v959, %v929
          %v961 = vadd.f32 %v960, %v930
          %v962 = vadd.f32 %v961, %v931
          %v963 = vadd.f32 %v962, %v932
          %v964 = vadd.f32 %v963, %v933
          %v965 = vadd.f32 %v964, %v934
          %v966 = vadd.f32 %v965, %v935
          %v967 = vadd.f32 %v966, %v936
          %v968 = vadd.f32 %v967, %v937
          %v969 = vadd.f32 %v968, %v938
          %v970 = vrot.slane %v969, 4
          %v971 = vadd.f32 %v969, %v970
          %v972 = vrot.slane %v971, 2
          %v973 = vadd.f32 %v971, %v972
          %v974 = vrot.slane %v973, 1
          %v975 = vadd.f32 %v973, %v974
          %v976 = vmul.f32 %v975, 0.00390625
          %v977 = vsub.f32 %v907, %v976
          %v978 = vsub.f32 %v908, %v976
          %v979 = vsub.f32 %v909, %v976
          %v980 = vsub.f32 %v910, %v976
          %v981 = vsub.f32 %v911, %v976
          %v982 = vsub.f32 %v912, %v976
          %v983 = vsub.f32 %v913, %v976
          %v984 = vsub.f32 %v914, %v976
          %v985 = vsub.f32 %v915, %v976
          %v986 = vsub.f32 %v916, %v976
          %v987 = vsub.f32 %v917, %v976
          %v988 = vsub.f32 %v918, %v976
          %v989 = vsub.f32 %v919, %v976
          %v990 = vsub.f32 %v920, %v976
          %v991 = vsub.f32 %v921, %v976
          %v992 = vsub.f32 %v922, %v976
          %v993 = vsub.f32 %v923, %v976
          %v994 = vsub.f32 %v924, %v976
          %v995 = vsub.f32 %v925, %v976
          %v996 = vsub.f32 %v926, %v976
          %v997 = vsub.f32 %v927, %v976
          %v998 = vsub.f32 %v928, %v976
          %v999 = vsub.f32 %v929, %v976
          %v1000 = vsub.f32 %v930, %v976
          %v1001 = vsub.f32 %v931, %v976
          %v1002 = vsub.f32 %v932, %v976
          %v1003 = vsub.f32 %v933, %v976
          %v1004 = vsub.f32 %v934, %v976
          %v1005 = vsub.f32 %v935, %v976
          %v1006 = vsub.f32 %v936, %v976
          %v1007 = vsub.f32 %v937, %v976
          %v1008 = vsub.f32 %v938, %v976
          %v1009 = vmul.f32 %v977, %v977
          %v1010 = vmul.f32 %v978, %v978
          %v1011 = vmul.f32 %v979, %v979
          %v1012 = vmul.f32 %v980, %v980
          %v1013 = vmul.f32 %v981, %v981
          %v1014 = vmul.f32 %v982, %v982
          %v1015 = vmul.f32 %v983, %v983
          %v1016 = vmul.f32 %v984, %v984
          %v1017 = vmul.f32 %v985, %v985
          %v1018 = vmul.f32 %v986, %v986
          %v1019 = vmul.f32 %v987, %v987
          %v1020 = vmul.f32 %v988, %v988
          %v1021 = vmul.f32 %v989, %v989
          %v1022 = vmul.f32 %v990, %v990
          %v1023 = vmul.f32 %v991, %v991
          %v1024 = vmul.f32 %v992, %v992
          %v1025 = vmul.f32 %v993, %v993
          %v1026 = vmul.f32 %v994, %v994
          %v1027 = vmul.f32 %v995, %v995
          %v1028 = vmul.f32 %v996, %v996
          %v1029 = vmul.f32 %v997, %v997
          %v1030 = vmul.f32 %v998, %v998
          %v1031 = vmul.f32 %v999, %v999
          %v1032 = vmul.f32 %v1000, %v1000
          %v1033 = vmul.f32 %v1001, %v1001
          %v1034 = vmul.f32 %v1002, %v1002
          %v1035 = vmul.f32 %v1003, %v1003
          %v1036 = vmul.f32 %v1004, %v1004
          %v1037 = vmul.f32 %v1005, %v1005
          %v1038 = vmul.f32 %v1006, %v1006
          %v1039 = vmul.f32 %v1007, %v1007
          %v1040 = vmul.f32 %v1008, %v1008
          %v1041 = vadd.f32 %v1009, %v1010
          %v1042 = vadd.f32 %v1041, %v1011
          %v1043 = vadd.f32 %v1042, %v1012
          %v1044 = vadd.f32 %v1043, %v1013
          %v1045 = vadd.f32 %v1044, %v1014
          %v1046 = vadd.f32 %v1045, %v1015
          %v1047 = vadd.f32 %v1046, %v1016
          %v1048 = vadd.f32 %v1047, %v1017
          %v1049 = vadd.f32 %v1048, %v1018
          %v1050 = vadd.f32 %v1049, %v1019
          %v1051 = vadd.f32 %v1050, %v1020
          %v1052 = vadd.f32 %v1051, %v1021
          %v1053 = vadd.f32 %v1052, %v1022
          %v1054 = vadd.f32 %v1053, %v1023
          %v1055 = vadd.f32 %v1054, %v1024
          %v1056 = vadd.f32 %v1055, %v1025
          %v1057 = vadd.f32 %v1056, %v1026
          %v1058 = vadd.f32 %v1057, %v1027
          %v1059 = vadd.f32 %v1058, %v1028
          %v1060 = vadd.f32 %v1059, %v1029
          %v1061 = vadd.f32 %v1060, %v1030
          %v1062 = vadd.f32 %v1061, %v1031
          %v1063 = vadd.f32 %v1062, %v1032
          %v1064 = vadd.f32 %v1063, %v1033
          %v1065 = vadd.f32 %v1064, %v1034
          %v1066 = vadd.f32 %v1065, %v1035
          %v1067 = vadd.f32 %v1066, %v1036
          %v1068 = vadd.f32 %v1067, %v1037
          %v1069 = vadd.f32 %v1068, %v1038
          %v1070 = vadd.f32 %v1069, %v1039
          %v1071 = vadd.f32 %v1070, %v1040
          %v1072 = vrot.slane %v1071, 4
          %v1073 = vadd.f32 %v1071, %v1072
          %v1074 = vrot.slane %v1073, 2
          %v1075 = vadd.f32 %v1073, %v1074
          %v1076 = vrot.slane %v1075, 1
          %v1077 = vadd.f32 %v1075, %v1076
          %v1078 = vmul.f32 %v1077, 0.00390625
          %v1079 = vadd.f32 %v1078, 1e-05
          %v1080 = vrsqrt.pop %v1079
          %v1081 = vmul.f32 %v1080, %v1079
          %v1082 = vmul.f32 %v1081, %v1080
          %v1083 = vmul.f32 0.5, %v1082
          %v1084 = vsub.f32 1.5, %v1083
          %v1085 = vmul.f32 %v1080, %v1084
          %vm1086 = vweird.f32 %v1079
          %vm1087 = vweird.f32 %v1080
          %vm1088 = vmor %vm1086, %vm1087
          %v1089 = vsel %vm1088, %v1080, %v1085
          %v1090 = vmul.f32 %v977, %v1089
          %v1091 = vmul.f32 %v978, %v1089
          %v1092 = vmul.f32 %v979, %v1089
          %v1093 = vmul.f32 %v980, %v1089
          %v1094 = vmul.f32 %v981, %v1089
          %v1095 = vmul.f32 %v982, %v1089
          %v1096 = vmul.f32 %v983, %v1089
          %v1097 = vmul.f32 %v984, %v1089
          %v1098 = vmul.f32 %v985, %v1089
          %v1099 = vmul.f32 %v986, %v1089
          %v1100 = vmul.f32 %v987, %v1089
          %v1101 = vmul.f32 %v988, %v1089
          %v1102 = vmul.f32 %v989, %v1089
          %v1103 = vmul.f32 %v990, %v1089
          %v1104 = vmul.f32 %v991, %v1089
          %v1105 = vmul.f32 %v992, %v1089
          %v1106 = vmul.f32 %v993, %v1089
          %v1107 = vmul.f32 %v994, %v1089
          %v1108 = vmul.f32 %v995, %v1089
          %v1109 = vmul.f32 %v996, %v1089
          %v1110 = vmul.f32 %v997, %v1089
          %v1111 = vmul.f32 %v998, %v1089
          %v1112 = vmul.f32 %v999, %v1089
          %v1113 = vmul.f32 %v1000, %v1089
          %v1114 = vmul.f32 %v1001, %v1089
          %v1115 = vmul.f32 %v1002, %v1089
          %v1116 = vmul.f32 %v1003, %v1089
          %v1117 = vmul.f32 %v1004, %v1089
          %v1118 = vmul.f32 %v1005, %v1089
          %v1119 = vmul.f32 %v1006, %v1089
          %v1120 = vmul.f32 %v1007, %v1089
          %v1121 = vmul.f32 %v1008, %v1089
          %v1122 = vld [vmem:[%s407] sm:$0x1]
          %v1124 = vperm.slane %v1122, 0
          %v1126 = vmul.f32 %v1090, %v1124
          %v1127 = vmul.f32 %v1091, %v1124
          %v1128 = vmul.f32 %v1092, %v1124
          %v1129 = vmul.f32 %v1093, %v1124
          %v1130 = vmul.f32 %v1094, %v1124
          %v1131 = vmul.f32 %v1095, %v1124
          %v1132 = vmul.f32 %v1096, %v1124
          %v1133 = vmul.f32 %v1097, %v1124
          %v1134 = vmul.f32 %v1098, %v1124
          %v1135 = vmul.f32 %v1099, %v1124
          %v1136 = vmul.f32 %v1100, %v1124
          %v1137 = vmul.f32 %v1101, %v1124
          %v1138 = vmul.f32 %v1102, %v1124
          %v1139 = vmul.f32 %v1103, %v1124
          %v1140 = vmul.f32 %v1104, %v1124
          %v1141 = vmul.f32 %v1105, %v1124
          %v1142 = vmul.f32 %v1106, %v1124
          %v1143 = vmul.f32 %v1107, %v1124
          %v1144 = vmul.f32 %v1108, %v1124
          %v1145 = vmul.f32 %v1109, %v1124
          %v1146 = vmul.f32 %v1110, %v1124
          %v1147 = vmul.f32 %v1111, %v1124
          %v1148 = vmul.f32 %v1112, %v1124
          %v1149 = vmul.f32 %v1113, %v1124
          %v1150 = vmul.f32 %v1114, %v1124
          %v1151 = vmul.f32 %v1115, %v1124
          %v1152 = vmul.f32 %v1116, %v1124
          %v1153 = vmul.f32 %v1117, %v1124
          %v1154 = vmul.f32 %v1118, %v1124
          %v1155 = vmul.f32 %v1119, %v1124
          %v1156 = vmul.f32 %v1120, %v1124
          %v1157 = vmul.f32 %v1121, %v1124
          %v1158 = vld [vmem:[%s363] sm:$0x1]
          %v1160 = vperm.slane %v1158, 0
          %v1162 = vadd.f32 %v1126, %v1160
          %v1163 = vadd.f32 %v1127, %v1160
          %v1164 = vadd.f32 %v1128, %v1160
          %v1165 = vadd.f32 %v1129, %v1160
          %v1166 = vadd.f32 %v1130, %v1160
          %v1167 = vadd.f32 %v1131, %v1160
          %v1168 = vadd.f32 %v1132, %v1160
          %v1169 = vadd.f32 %v1133, %v1160
          %v1170 = vadd.f32 %v1134, %v1160
          %v1171 = vadd.f32 %v1135, %v1160
          %v1172 = vadd.f32 %v1136, %v1160
          %v1173 = vadd.f32 %v1137, %v1160
          %v1174 = vadd.f32 %v1138, %v1160
          %v1175 = vadd.f32 %v1139, %v1160
          %v1176 = vadd.f32 %v1140, %v1160
          %v1177 = vadd.f32 %v1141, %v1160
          %v1178 = vadd.f32 %v1142, %v1160
          %v1179 = vadd.f32 %v1143, %v1160
          %v1180 = vadd.f32 %v1144, %v1160
          %v1181 = vadd.f32 %v1145, %v1160
          %v1182 = vadd.f32 %v1146, %v1160
          %v1183 = vadd.f32 %v1147, %v1160
          %v1184 = vadd.f32 %v1148, %v1160
          %v1185 = vadd.f32 %v1149, %v1160
          %v1186 = vadd.f32 %v1150, %v1160
          %v1187 = vadd.f32 %v1151, %v1160
          %v1188 = vadd.f32 %v1152, %v1160
          %v1189 = vadd.f32 %v1153, %v1160
          %v1190 = vadd.f32 %v1154, %v1160
          %v1191 = vadd.f32 %v1155, %v1160
          %v1192 = vadd.f32 %v1156, %v1160
          %v1193 = vadd.f32 %v1157, %v1160
          %p1194 = scmp.lt.s32.totalorder %s26, 2
          // Predicated region
          $region73: #{tpu_custom_call.1} parent=71 // pred_check
            %p1195 = pneg %p1194
          $region74: #{tpu_custom_call.1} parent=71 // pred_check_branch
            %1197 = sbr.rel (%p1195) target = $region76
          $region75: #{tpu_custom_call.1} parent=71 // pred_region
            %v1198 = vmax.f32 %v1162, 0.0
            %v1199 = vmax.f32 %v1163, 0.0
            %v1200 = vmax.f32 %v1164, 0.0
            %v1201 = vmax.f32 %v1165, 0.0
            %v1202 = vmax.f32 %v1166, 0.0
            %v1203 = vmax.f32 %v1167, 0.0
            %v1204 = vmax.f32 %v1168, 0.0
            %v1205 = vmax.f32 %v1169, 0.0
            %v1206 = vmax.f32 %v1170, 0.0
            %v1207 = vmax.f32 %v1171, 0.0
            %v1208 = vmax.f32 %v1172, 0.0
            %v1209 = vmax.f32 %v1173, 0.0
            %v1210 = vmax.f32 %v1174, 0.0
            %v1211 = vmax.f32 %v1175, 0.0
            %v1212 = vmax.f32 %v1176, 0.0
            %v1213 = vmax.f32 %v1177, 0.0
            %v1214 = vmax.f32 %v1178, 0.0
            %v1215 = vmax.f32 %v1179, 0.0
            %v1216 = vmax.f32 %v1180, 0.0
            %v1217 = vmax.f32 %v1181, 0.0
            %v1218 = vmax.f32 %v1182, 0.0
            %v1219 = vmax.f32 %v1183, 0.0
            %v1220 = vmax.f32 %v1184, 0.0
            %v1221 = vmax.f32 %v1185, 0.0
            %v1222 = vmax.f32 %v1186, 0.0
            %v1223 = vmax.f32 %v1187, 0.0
            %v1224 = vmax.f32 %v1188, 0.0
            %v1225 = vmax.f32 %v1189, 0.0
            %v1226 = vmax.f32 %v1190, 0.0
            %v1227 = vmax.f32 %v1191, 0.0
            %v1228 = vmax.f32 %v1192, 0.0
            %v1229 = vmax.f32 %v1193, 0.0
            %v1230 = vpack.c.bf16 %v1198, %v1198
            %v1231 = vpack.c.bf16 %v1199, %v1199
            %v1232 = vpack.c.bf16 %v1200, %v1200
            %v1233 = vpack.c.bf16 %v1201, %v1201
            %v1234 = vpack.c.bf16 %v1202, %v1202
            %v1235 = vpack.c.bf16 %v1203, %v1203
            %v1236 = vpack.c.bf16 %v1204, %v1204
            %v1237 = vpack.c.bf16 %v1205, %v1205
            %v1238 = vpack.c.bf16 %v1206, %v1206
            %v1239 = vpack.c.bf16 %v1207, %v1207
            %v1240 = vpack.c.bf16 %v1208, %v1208
            %v1241 = vpack.c.bf16 %v1209, %v1209
            %v1242 = vpack.c.bf16 %v1210, %v1210
            %v1243 = vpack.c.bf16 %v1211, %v1211
            %v1244 = vpack.c.bf16 %v1212, %v1212
            %v1245 = vpack.c.bf16 %v1213, %v1213
            %v1246 = vpack.c.bf16 %v1214, %v1214
            %v1247 = vpack.c.bf16 %v1215, %v1215
            %v1248 = vpack.c.bf16 %v1216, %v1216
            %v1249 = vpack.c.bf16 %v1217, %v1217
            %v1250 = vpack.c.bf16 %v1218, %v1218
            %v1251 = vpack.c.bf16 %v1219, %v1219
            %v1252 = vpack.c.bf16 %v1220, %v1220
            %v1253 = vpack.c.bf16 %v1221, %v1221
            %v1254 = vpack.c.bf16 %v1222, %v1222
            %v1255 = vpack.c.bf16 %v1223, %v1223
            %v1256 = vpack.c.bf16 %v1224, %v1224
            %v1257 = vpack.c.bf16 %v1225, %v1225
            %v1258 = vpack.c.bf16 %v1226, %v1226
            %v1259 = vpack.c.bf16 %v1227, %v1227
            %v1260 = vpack.c.bf16 %v1228, %v1228
            %v1261 = vpack.c.bf16 %v1229, %v1229
            %1262 = vst [vmem:[#allocation2] sm:$0xf] %v1230
            %1263 = vst [vmem:[#allocation2 + $0x4] sm:$0xf] %v1231
            %1264 = vst [vmem:[#allocation2 + $0x8] sm:$0xf] %v1232
            %1265 = vst [vmem:[#allocation2 + $0xc] sm:$0xf] %v1233
            %1266 = vst [vmem:[#allocation2 + $0x10] sm:$0xf] %v1234
            %1267 = vst [vmem:[#allocation2 + $0x14] sm:$0xf] %v1235
            %1268 = vst [vmem:[#allocation2 + $0x18] sm:$0xf] %v1236
            %1269 = vst [vmem:[#allocation2 + $0x1c] sm:$0xf] %v1237
            %1270 = vst [vmem:[#allocation2 + $0x20] sm:$0xf] %v1238
            %1271 = vst [vmem:[#allocation2 + $0x24] sm:$0xf] %v1239
            %1272 = vst [vmem:[#allocation2 + $0x28] sm:$0xf] %v1240
            %1273 = vst [vmem:[#allocation2 + $0x2c] sm:$0xf] %v1241
            %1274 = vst [vmem:[#allocation2 + $0x30] sm:$0xf] %v1242
            %1275 = vst [vmem:[#allocation2 + $0x34] sm:$0xf] %v1243
            %1276 = vst [vmem:[#allocation2 + $0x38] sm:$0xf] %v1244
            %1277 = vst [vmem:[#allocation2 + $0x3c] sm:$0xf] %v1245
            %1278 = vst [vmem:[#allocation2 + $0x40] sm:$0xf] %v1246
            %1279 = vst [vmem:[#allocation2 + $0x44] sm:$0xf] %v1247
            %1280 = vst [vmem:[#allocation2 + $0x48] sm:$0xf] %v1248
            %1281 = vst [vmem:[#allocation2 + $0x4c] sm:$0xf] %v1249
            %1282 = vst [vmem:[#allocation2 + $0x50] sm:$0xf] %v1250
            %1283 = vst [vmem:[#allocation2 + $0x54] sm:$0xf] %v1251
            %1284 = vst [vmem:[#allocation2 + $0x58] sm:$0xf] %v1252
            %1285 = vst [vmem:[#allocation2 + $0x5c] sm:$0xf] %v1253
            %1286 = vst [vmem:[#allocation2 + $0x60] sm:$0xf] %v1254
            %1287 = vst [vmem:[#allocation2 + $0x64] sm:$0xf] %v1255
            %1288 = vst [vmem:[#allocation2 + $0x68] sm:$0xf] %v1256
            %1289 = vst [vmem:[#allocation2 + $0x6c] sm:$0xf] %v1257
            %1290 = vst [vmem:[#allocation2 + $0x70] sm:$0xf] %v1258
            %1291 = vst [vmem:[#allocation2 + $0x74] sm:$0xf] %v1259
            %1292 = vst [vmem:[#allocation2 + $0x78] sm:$0xf] %v1260
            %1293 = vst [vmem:[#allocation2 + $0x7c] sm:$0xf] %v1261
          $region76: #{tpu_custom_call.1} parent=71 // pred_fallthru
            _
          %p1294 = scmp.eq.s32.totalorder %s26, 2
          // Predicated region
          $region77: #{tpu_custom_call.1} parent=71 // pred_check
            %p1295 = pneg %p1294
          $region78: #{tpu_custom_call.1} parent=71 // pred_check_branch
            %1297 = sbr.rel (%p1295) target = $region80
          $region79: #{tpu_custom_call.1} parent=71 // pred_region
            %1298 = vst [vmem:[#allocation12] sm:$0xff] %v1162
            %1299 = vst [vmem:[#allocation12 + $0x8] sm:$0xff] %v1163
            %1300 = vst [vmem:[#allocation12 + $0x10] sm:$0xff] %v1164
            %1301 = vst [vmem:[#allocation12 + $0x18] sm:$0xff] %v1165
            %1302 = vst [vmem:[#allocation12 + $0x20] sm:$0xff] %v1166
            %1303 = vst [vmem:[#allocation12 + $0x28] sm:$0xff] %v1167
            %1304 = vst [vmem:[#allocation12 + $0x30] sm:$0xff] %v1168
            %1305 = vst [vmem:[#allocation12 + $0x38] sm:$0xff] %v1169
            %1306 = vst [vmem:[#allocation12 + $0x40] sm:$0xff] %v1170
            %1307 = vst [vmem:[#allocation12 + $0x48] sm:$0xff] %v1171
            %1308 = vst [vmem:[#allocation12 + $0x50] sm:$0xff] %v1172
            %1309 = vst [vmem:[#allocation12 + $0x58] sm:$0xff] %v1173
            %1310 = vst [vmem:[#allocation12 + $0x60] sm:$0xff] %v1174
            %1311 = vst [vmem:[#allocation12 + $0x68] sm:$0xff] %v1175
            %1312 = vst [vmem:[#allocation12 + $0x70] sm:$0xff] %v1176
            %1313 = vst [vmem:[#allocation12 + $0x78] sm:$0xff] %v1177
            %1314 = vst [vmem:[#allocation12 + $0x80] sm:$0xff] %v1178
            %1315 = vst [vmem:[#allocation12 + $0x88] sm:$0xff] %v1179
            %1316 = vst [vmem:[#allocation12 + $0x90] sm:$0xff] %v1180
            %1317 = vst [vmem:[#allocation12 + $0x98] sm:$0xff] %v1181
            %1318 = vst [vmem:[#allocation12 + $0xa0] sm:$0xff] %v1182
            %1319 = vst [vmem:[#allocation12 + $0xa8] sm:$0xff] %v1183
            %1320 = vst [vmem:[#allocation12 + $0xb0] sm:$0xff] %v1184
            %1321 = vst [vmem:[#allocation12 + $0xb8] sm:$0xff] %v1185
            %1322 = vst [vmem:[#allocation12 + $0xc0] sm:$0xff] %v1186
            %1323 = vst [vmem:[#allocation12 + $0xc8] sm:$0xff] %v1187
            %1324 = vst [vmem:[#allocation12 + $0xd0] sm:$0xff] %v1188
            %1325 = vst [vmem:[#allocation12 + $0xd8] sm:$0xff] %v1189
            %1326 = vst [vmem:[#allocation12 + $0xe0] sm:$0xff] %v1190
            %1327 = vst [vmem:[#allocation12 + $0xe8] sm:$0xff] %v1191
            %1328 = vst [vmem:[#allocation12 + $0xf0] sm:$0xff] %v1192
            %1329 = vst [vmem:[#allocation12 + $0xf8] sm:$0xff] %v1193
          $region80: #{tpu_custom_call.1} parent=71 // pred_fallthru
            _
        $region72: #{tpu_custom_call.1} parent=43 // pred_fallthru
          _
        // Predicated region
        $region81: #{tpu_custom_call.1} parent=43 // pred_check
          %p1330 = pneg %p198
        $region82: #{tpu_custom_call.1} parent=43 // pred_check_branch
          %1332 = sbr.rel (%p1330) target = $region84
        $region83: #{tpu_custom_call.1} parent=43 // pred_region
          %1334 = vsyncadd [#allocation6], 0
          %s1335 = sshll.u32 [#allocation12], 4
          %s1336 = int_to_ptr.vmem [resolvable:$true] %s1335
          %s1337 = sshll.u32 %s6, 4
          %s1338 = int_to_ptr.hbm [resolvable:$true] %s1337
          %1343 = dma.vmem_to_hbm [thread:$0]  %s1336, 4096, %s1338, [#allocation6], 128, 128, 8
        $region84: #{tpu_custom_call.1} parent=43 // pred_fallthru
          _
        // Predicated region
        $region85: #{tpu_custom_call.1} parent=43 // pred_check
          %p1344 = pneg %p198
        $region86: #{tpu_custom_call.1} parent=43 // pred_check_branch
          %1346 = sbr.rel (%p1344) target = $region88
        $region87: #{tpu_custom_call.1} parent=43 // pred_region
          %1348 = dma.done [#allocation6], 4096
        $region88: #{tpu_custom_call.1} parent=43 // pred_fallthru
          _
      $region44: #{tpu_custom_call.1} parent=5 // pred_fallthru
        _
      %p1349 = scmp.le.s32.totalorder 2, %s17
      // Predicated region
      $region89: #{tpu_custom_call.1} parent=5 // pred_check
        %p1350 = pneg %p1349
      $region90: #{tpu_custom_call.1} parent=5 // pred_check_branch
        %1352 = sbr.rel (%p1350) target = $region92
      $region91: #{tpu_custom_call.1} parent=5 // pred_region
        %s1353 = ssub.s32 %s17, 2
      $region92: #{tpu_custom_call.1} parent=5 // pred_fallthru
        _
    $region6: #{tpu_custom_call.1} parent=1 // loop_footer
      %s21 = sadd.s32 1, %s17
    $region7: #{tpu_custom_call.1} parent=1 // loop_footer_branch
      %16 = sbr.rel target = $region3
    $region8: #{tpu_custom_call.1} parent=1 // loop_exit
      _
    %1354 = vsyncpa [#allocation5], 1
    %s1355 = scalar_lea.sflag [#allocation5], 1
    %1356 = vsyncpa %s1355, 1
    %1357 = vsyncpa [#allocation8], 1
    %1358 = vsyncpa [#allocation6], 1
    %s1359 = scalar_lea.sflag [#allocation6], 1
    %1360 = vsyncpa %s1359, 1

</llo_original>
